<compile_context>
chip_gen: v5e
topology: v5e:2x2
jax: 0.10.0
libtpu: 0.0.40
codegen_flags: <defaults>
</compile_context>

<pallas_src>
import math
import numpy as np
import jax
import jax.numpy as jnp
from jax.experimental import pallas as pl
from jax.experimental.pallas import tpu as pltpu

# ----------------------------- configuration --------------------------------
B = 2                 # batch
L = 8                 # sequence length (<= PE table max_len)
DEC_IN = 7            # dec_in
D_MODEL = 32
D_STATE = 16
D_CONV = 4
D_MARK = 4            # timeF features for freq='h'
EXPAND = 2
D_INNER = EXPAND * D_MODEL           # 64
DT_RANK = math.ceil(D_MODEL / 16)    # 2
D_LAYERS = 1
LN_EPS = 1e-5

PER_LAYER = 10        # packed parameter tensors per Mamba layer


# ----------------------------- small helpers --------------------------------
def _silu(x):
    # x * sigmoid(x) with sigmoid in the stable tanh form (single EUP op,
    # no exp() overflow for large |x|).
    return x * (0.5 * (jnp.tanh(0.5 * x) + 1.0))


def _softplus(x):
    return jnp.maximum(x, 0.0) + jnp.log1p(jnp.exp(-jnp.abs(x)))


def _mxu_dot(a, w):
    # Single-pass MXU matmul: bf16 operands, f32 accumulation (review: no
    # HIGHEST-precision multi-pass emulation).
    return jnp.dot(a.astype(jnp.bfloat16), w.astype(jnp.bfloat16),
                   preferred_element_type=jnp.float32)


# ============================ fused Pallas kernel ============================

def fused_model_kernel(vlen_ref, xdec_ref, xmark_ref, wtok_ref, wtime_ref,
                       pe_ref, *rest):
    """Single fused kernel: DataEmbedding + all Mamba layers, one grid step.

    Activations stay flattened as (B*L, features): batch+sequence ride the
    sublane axis, features ride the lane axis.
    """
    out_ref = rest[-1]
    layer_refs = rest[:-1]

    Lc = pe_ref.shape[0]
    BL, dm = out_ref.shape
    Bn = BL // Lc
    f32 = jnp.float32

    # ----------------------------- DataEmbedding ----------------------------
    # TokenEmbedding: circular Conv1d(k=3) as ONE fused matmul over the three
    # taps, then per-batch circular shifts of the resulting tap slabs.
    taps = _mxu_dot(xdec_ref[...], wtok_ref[...])            # (B*L, 3*d_model)
    t0 = taps[:, :dm]
    t1 = taps[:, dm:2 * dm]
    t2 = taps[:, 2 * dm:]
    tok_rows = []
    for b in range(Bn):
        r0 = b * Lc
        p0 = t0[r0:r0 + Lc]
        p1 = t1[r0:r0 + Lc]
        p2 = t2[r0:r0 + Lc]
        # token[l] = P0[(l-1) % L] + P1[l] + P2[(l+1) % L]
        p0r = jnp.concatenate([p0[Lc - 1:Lc], p0[:Lc - 1]], axis=0)
        p2r = jnp.concatenate([p2[1:], p2[:1]], axis=0)
        tok_rows.append(p0r + p1 + p2r)
    tok = jnp.concatenate(tok_rows, axis=0)                  # (B*L, d_model)

    # TimeFeatureEmbedding (linear, no bias)
    tmark = _mxu_dot(xmark_ref[...], wtime_ref[...])         # (B*L, d_model)

    # PositionalEmbedding, masked per batch by visit_len (pad rows -> 0)
    li = jax.lax.broadcasted_iota(jnp.int32, (Lc, 1), 0)
    pos_rows = []
    for b in range(Bn):
        pos_rows.append(jnp.where(li < vlen_ref[b], pe_ref[...], 0.0))
    pos = jnp.concatenate(pos_rows, axis=0)                  # (B*L, d_model)

    x = tok + tmark + pos          # dropout(p=0.3) is identity in eval mode

    # ------------------------------ Mamba layers ----------------------------
    n_layers = len(layer_refs) // PER_LAYER
    for layer in range(n_layers):
        (win_ref, convw_ref, convb_ref, wssm_ref, bdt_ref, alogt_ref,
         dskip_ref, wout_ref, lng_ref, lnb_ref) = \
            layer_refs[layer * PER_LAYER:(layer + 1) * PER_LAYER]

        d_in = convw_ref.shape[1]          # d_inner
        n = alogt_ref.shape[0]             # d_state
        kconv = convw_ref.shape[0]

        # in_proj: one fused (d_model -> 2*d_inner) matmul, split afterwards.
        xz_res = _mxu_dot(x, win_ref[...])                   # (B*L, 2*d_inner)
        xz = xz_res[:, :d_in]
        res = xz_res[:, d_in:]

        # Depthwise causal conv1d over the sequence (zero left pad), done with
        # shifted slices per batch; the bias add is hoisted out of the k-loop.
        xc_rows = []
        for b in range(Bn):
            xz_b = xz[b * Lc:(b + 1) * Lc]                   # (L, d_inner)
            acc = jnp.zeros((Lc, d_in), f32) + convb_ref[...]
            for k in range(kconv):
                s = kconv - 1 - k                            # causal shift
                if s == 0:
                    acc = acc + xz_b * convw_ref[k:k + 1, :]
                else:
                    sh = jnp.concatenate(
                        [jnp.zeros((s, d_in), f32), xz_b[:Lc - s]], axis=0)
                    acc = acc + sh * convw_ref[k:k + 1, :]
            xc_rows.append(acc)
        xc = jnp.concatenate(xc_rows, axis=0)                # (B*L, d_inner)
        u = _silu(xc)

        # Fused SSM projection: [delta_pre | B | C] in one matmul.  The
        # dt_rank bottleneck (x_proj delta slice @ dt_proj) is pre-folded into
        # the weight in the wrapper, so no K=2 matmul remains.
        proj = _mxu_dot(u, wssm_ref[...])                    # (B*L, d_in + 2n)
        delta = _softplus(proj[:, :d_in] + bdt_ref[...])     # (B*L, d_inner)
        Bm = proj[:, d_in:d_in + n]                          # (B*L, n)
        Cm = proj[:, d_in + n:]                              # (B*L, n)

        # Selective scan.  State layout: d_inner on LANES, d_state on SUBLANES;
        # the readout y_t is computed inside the loop (no h-history scratch).
        A_t = -jnp.exp(alogt_ref[...])                       # (n, d_inner)
        du = delta * u                                       # (B*L, d_inner)
        Bcol = Bm[:, :, None]                                # (B*L, n, 1)
        Ccol = Cm[:, :, None]                                # (B*L, n, 1)

        y_rows = []
        for b in range(Bn):
            h = jnp.zeros((n, d_in), f32)
            ys_b = []
            for t in range(Lc):
                r = b * Lc + t
                dA = jnp.exp(delta[r:r + 1, :] * A_t)        # (n, d_inner)
                h = dA * h + du[r:r + 1, :] * Bcol[r]        # (n, d_inner)
                # sublane-direction reduce over d_state
                ys_b.append(jnp.sum(h * Ccol[r], axis=0, keepdims=True))
            y_rows.append(jnp.concatenate(ys_b, axis=0))     # (L, d_inner)
        y = jnp.concatenate(y_rows, axis=0)                  # (B*L, d_inner)

        y = y + u * dskip_ref[...]                           # D skip path
        y = y * _silu(res)                                   # gate

        out = _mxu_dot(y, wout_ref[...])                     # (B*L, d_model)

        # residual + LayerNorm
        xn = x + out
        mu = jnp.mean(xn, axis=-1, keepdims=True)
        var = jnp.mean((xn - mu) * (xn - mu), axis=-1, keepdims=True)
        x = (xn - mu) * jax.lax.rsqrt(var + LN_EPS) * lng_ref[...] + lnb_ref[...]

    out_ref[...] = x


# ================================ wrapper ====================================

def mamba_model(x_dec, visit_len, x_mark, params):
    """Single fused pallas_call for the whole forward pass."""
    w_tok, w_time, pe, layers = params
    Bn, Ln, Ci = x_dec.shape
    dmk = x_mark.shape[2]
    BL = Bn * Ln

    inputs = [x_dec.reshape(BL, Ci), x_mark.reshape(BL, dmk), w_tok, w_time, pe]
    for lp in layers:
        inputs.extend(lp)

    def full_spec(a):
        nd = a.ndim
        return pl.BlockSpec(a.shape, lambda i, vl, _nd=nd: (0,) * _nd)

    grid_spec = pltpu.PrefetchScalarGridSpec(
        num_scalar_prefetch=1,               # visit_len -> SMEM scalars
        grid=(1,),                           # one grid step: everything fused
        in_specs=[full_spec(a) for a in inputs],
        out_specs=pl.BlockSpec((BL, D_MODEL), lambda i, vl: (0, 0)),
    )
    out = pl.pallas_call(
        fused_model_kernel,
        out_shape=jax.ShapeDtypeStruct((BL, D_MODEL), jnp.float32),
        grid_spec=grid_spec,
        compiler_params=pltpu.CompilerParams(
            dimension_semantics=("arbitrary",)),
    )(visit_len, *inputs)
    return out.reshape(Bn, Ln, D_MODEL)


# ============================ parameter init =================================

def init_params(key):
    ks = jax.random.split(key, 9)
    s = 0.1
    high = jax.lax.Precision.HIGHEST

    conv_tok_w = s * jax.random.normal(ks[0], (D_MODEL, DEC_IN, 3), jnp.float32)
    wt_w = s * jax.random.normal(ks[1], (D_MODEL, D_MARK), jnp.float32)

    # sinusoid positional table, rows 0..L-1
    j = np.arange(D_MODEL)
    pos = np.arange(L)[:, None]
    angle = pos / np.power(10000.0, 2.0 * (j // 2) / D_MODEL)[None, :]
    pe = np.zeros((L, D_MODEL), np.float32)
    pe[:, 0::2] = np.sin(angle[:, 0::2])
    pe[:, 1::2] = np.cos(angle[:, 1::2])
    pe = jnp.asarray(pe)

    # fused embedding weights: 3 circular-conv taps stacked along columns
    w_tok = jnp.concatenate([conv_tok_w[:, :, k].T for k in range(3)], axis=1)
    w_time = wt_w.T                                          # (d_mark, d_model)

    # raw Mamba layer weights (PyTorch shapes)
    w_in = s * jax.random.normal(ks[2], (2 * D_INNER, D_MODEL), jnp.float32)
    conv_w = s * jax.random.normal(ks[3], (D_INNER, 1, D_CONV), jnp.float32)
    conv_b = 0.05 * jax.random.normal(ks[4], (D_INNER,), jnp.float32)
    w_x = s * jax.random.normal(ks[5], (DT_RANK + 2 * D_STATE, D_INNER),
                                jnp.float32)
    w_dt = s * jax.random.normal(ks[6], (D_INNER, DT_RANK), jnp.float32)
    b_dt = 0.05 * jax.random.normal(ks[7], (D_INNER,), jnp.float32)
    a_log = jnp.log(jnp.broadcast_to(
        jnp.arange(1, D_STATE + 1, dtype=jnp.float32), (D_INNER, D_STATE)))
    d_skip = jnp.ones((D_INNER,), jnp.float32)
    w_out = s * jax.random.normal(ks[8], (D_MODEL, D_INNER), jnp.float32)
    ln_g = jnp.ones((D_MODEL,), jnp.float32)
    ln_b = jnp.zeros((D_MODEL,), jnp.float32)

    # packed / fused kernel layout
    wdelta = w_x[:DT_RANK].T                         # (d_inner, dt_rank)
    wB = w_x[DT_RANK:DT_RANK + D_STATE].T            # (d_inner, d_state)
    wC = w_x[DT_RANK + D_STATE:].T                   # (d_inner, d_state)
    wdt = w_dt.T                                     # (dt_rank, d_inner)
    # fold the dt_rank bottleneck into one (d_inner, d_inner) weight (exact,
    # done once in f32 at weight-prep time)
    w_delta_fused = jnp.dot(wdelta, wdt, precision=high)
    w_ssm = jnp.concatenate([w_delta_fused, wB, wC], axis=1)   # (64, 96)

    layer_params = (
        w_in.T,                              # (d_model, 2*d_inner)  [x | res]
        jnp.transpose(conv_w[:, 0, :]),      # (d_conv, d_inner)
        conv_b[None, :],                     # (1, d_inner)
        w_ssm,                               # (d_inner, d_inner + 2*d_state)
        b_dt[None, :],                       # (1, d_inner)
        a_log.T,                             # (d_state, d_inner)  transposed
        d_skip[None, :],                     # (1, d_inner)
        w_out.T,                             # (d_inner, d_model)
        ln_g[None, :],                       # (1, d_model)
        ln_b[None, :],                       # (1, d_model)
    )
    layers = tuple(layer_params for _ in range(D_LAYERS))
    return w_tok, w_time, pe, layers


# ============================ pure-JAX reference =============================

def reference_model(x_dec, visit_len, x_mark, params):
    w_tok, w_time, pe, layers = params
    Bn, Ln, _ = x_dec.shape
    dm = w_time.shape[1]

    def bdot(a, w):     # same operand rounding as the kernel's MXU dots
        return jnp.einsum('blc,cf->blf', a.astype(jnp.bfloat16),
                          w.astype(jnp.bfloat16),
                          preferred_element_type=jnp.float32)

    taps = bdot(x_dec, w_tok)
    t0, t1, t2 = taps[..., :dm], taps[..., dm:2 * dm], taps[..., 2 * dm:]
    tok = jnp.roll(t0, 1, axis=1) + t1 + jnp.roll(t2, -1, axis=1)
    tm = bdot(x_mark, w_time)
    mask = (jnp.arange(Ln)[None, :] < visit_len[:, None])[:, :, None]
    x = tok + tm + jnp.where(mask, pe[None], 0.0)

    for lp in layers:
        (w_in, conv_w, conv_b, w_ssm, b_dt, a_log_t, d_skip, w_out,
         ln_g, ln_b) = lp
        d_in = conv_w.shape[1]
        n = a_log_t.shape[0]
        K = conv_w.shape[0]

        xz_res = bdot(x, w_in)
        xz, res = xz_res[..., :d_in], xz_res[..., d_in:]
        xpad = jnp.concatenate(
            [jnp.zeros((Bn, K - 1, d_in), jnp.float32), xz], axis=1)
        xc = jnp.zeros_like(xz) + conv_b
        for k in range(K):
            xc = xc + xpad[:, k:k + Ln, :] * conv_w[k][None, None, :]
        u = _silu(xc)

        proj = bdot(u, w_ssm)
        delta = _softplus(proj[..., :d_in] + b_dt)
        Bm = proj[..., d_in:d_in + n]
        Cm = proj[..., d_in + n:]

        A = -jnp.exp(a_log_t)                                  # (n, d_in)
        dA = jnp.exp(delta[:, :, None, :] * A[None, None, :, :])
        dBu = (delta * u)[:, :, None, :] * Bm[:, :, :, None]
        h = jnp.zeros((Bn, n, d_in), jnp.float32)
        ys = []
        for i in range(Ln):
            h = dA[:, i] * h + dBu[:, i]
            ys.append(jnp.sum(h * Cm[:, i, :, None], axis=1))  # (B, d_in)
        y = jnp.stack(ys, axis=1)
        y = y + u * d_skip
        y = y * _silu(res)
        out = bdot(y, w_out)

        xn = x + out
        mu = jnp.mean(xn, axis=-1, keepdims=True)
        var = jnp.mean((xn - mu) ** 2, axis=-1, keepdims=True)
        x = (xn - mu) * jax.lax.rsqrt(var + LN_EPS) * ln_g + ln_b
    return x


# ================================= main ======================================

if __name__ == "__main__":
    key = jax.random.PRNGKey(0)
    k1, k2, k3, kp = jax.random.split(key, 4)
    x_dec = jax.random.normal(k1, (B, L, DEC_IN), jnp.float32)
    x_mark = jax.random.normal(k2, (B, L, D_MARK), jnp.float32)
    visit_len = jax.random.randint(k3, (B,), 1, L + 1, dtype=jnp.int32)
    params = init_params(kp)

    out = mamba_model(x_dec, visit_len, x_mark, params)
    out = jax.block_until_ready(out)

    ref = reference_model(x_dec, visit_len, x_mark, params)
    np.testing.assert_allclose(np.asarray(out), np.asarray(ref),
                               rtol=1e-2, atol=1e-2)
    print("KERNEL_OK")
</pallas_src>

<mosaic_0001>
module attributes {stable_mosaic.version = 11 : i64} {
  func.func @fused_model_kernel(%arg0: i32, %arg1: memref<2xi32, #tpu.memory_space<smem>>, %arg2: memref<16x7xf32, #tpu.memory_space<vmem>>, %arg3: memref<16x4xf32, #tpu.memory_space<vmem>>, %arg4: memref<7x96xf32, #tpu.memory_space<vmem>>, %arg5: memref<4x32xf32, #tpu.memory_space<vmem>>, %arg6: memref<8x32xf32, #tpu.memory_space<vmem>>, %arg7: memref<32x128xf32, #tpu.memory_space<vmem>>, %arg8: memref<4x64xf32, #tpu.memory_space<vmem>>, %arg9: memref<1x64xf32, #tpu.memory_space<vmem>>, %arg10: memref<64x96xf32, #tpu.memory_space<vmem>>, %arg11: memref<1x64xf32, #tpu.memory_space<vmem>>, %arg12: memref<16x64xf32, #tpu.memory_space<vmem>>, %arg13: memref<1x64xf32, #tpu.memory_space<vmem>>, %arg14: memref<64x32xf32, #tpu.memory_space<vmem>>, %arg15: memref<1x32xf32, #tpu.memory_space<vmem>>, %arg16: memref<1x32xf32, #tpu.memory_space<vmem>>, %arg17: memref<16x32xf32, #tpu.memory_space<vmem>>) attributes {dimension_semantics = [#tpu.dimension_semantics<arbitrary>], iteration_bounds = array<i64: 1>, scalar_prefetch = 1 : i64, scratch_operands = 0 : i64, tpu.core_type = #tpu.core_type<tc>, window_params = [{pipeline_mode = #tpu.pipeline_mode<synchronous>, transform_indices = @transform_0, window_bounds = array<i64: 16, 7>}, {pipeline_mode = #tpu.pipeline_mode<synchronous>, transform_indices = @transform_1, window_bounds = array<i64: 16, 4>}, {pipeline_mode = #tpu.pipeline_mode<synchronous>, transform_indices = @transform_2, window_bounds = array<i64: 7, 96>}, {pipeline_mode = #tpu.pipeline_mode<synchronous>, transform_indices = @transform_3, window_bounds = array<i64: 4, 32>}, {pipeline_mode = #tpu.pipeline_mode<synchronous>, transform_indices = @transform_4, window_bounds = array<i64: 8, 32>}, {pipeline_mode = #tpu.pipeline_mode<synchronous>, transform_indices = @transform_5, window_bounds = array<i64: 32, 128>}, {pipeline_mode = #tpu.pipeline_mode<synchronous>, transform_indices = @transform_6, window_bounds = array<i64: 4, 64>}, {pipeline_mode = #tpu.pipeline_mode<synchronous>, transform_indices = @transform_7, window_bounds = array<i64: 1, 64>}, {pipeline_mode = #tpu.pipeline_mode<synchronous>, transform_indices = @transform_8, window_bounds = array<i64: 64, 96>}, {pipeline_mode = #tpu.pipeline_mode<synchronous>, transform_indices = @transform_9, window_bounds = array<i64: 1, 64>}, {pipeline_mode = #tpu.pipeline_mode<synchronous>, transform_indices = @transform_10, window_bounds = array<i64: 16, 64>}, {pipeline_mode = #tpu.pipeline_mode<synchronous>, transform_indices = @transform_11, window_bounds = array<i64: 1, 64>}, {pipeline_mode = #tpu.pipeline_mode<synchronous>, transform_indices = @transform_12, window_bounds = array<i64: 64, 32>}, {pipeline_mode = #tpu.pipeline_mode<synchronous>, transform_indices = @transform_13, window_bounds = array<i64: 1, 32>}, {pipeline_mode = #tpu.pipeline_mode<synchronous>, transform_indices = @transform_14, window_bounds = array<i64: 1, 32>}, {pipeline_mode = #tpu.pipeline_mode<synchronous>, transform_indices = @transform_15, window_bounds = array<i64: 16, 32>}]} {
    %c0 = arith.constant 0 : index
    %c0_0 = arith.constant 0 : index
    %0 = vector.load %arg2[%c0, %c0_0] : memref<16x7xf32, #tpu.memory_space<vmem>>, vector<16x7xf32>
    %c0_1 = arith.constant 0 : index
    %c0_2 = arith.constant 0 : index
    %1 = vector.load %arg4[%c0_1, %c0_2] : memref<7x96xf32, #tpu.memory_space<vmem>>, vector<7x96xf32>
    %2 = arith.truncf %0 : vector<16x7xf32> to vector<16x7xbf16>
    %3 = arith.truncf %1 : vector<7x96xf32> to vector<7x96xbf16>
    %cst = arith.constant dense<0.000000e+00> : vector<16x96xf32>
    %4 = tpu.matmul %2, %3, %cst {dimension_numbers = #tpu.dot_dimension_numbers<[1], [0], [0], [1], [0, 0, 1, 1], [], []>} : vector<16x7xbf16>, vector<7x96xbf16>, vector<16x96xf32> -> vector<16x96xf32>
    %5 = vector.extract_strided_slice %4 {offsets = [0, 0], sizes = [16, 32], strides = [1, 1]} : vector<16x96xf32> to vector<16x32xf32>
    %6 = vector.extract_strided_slice %4 {offsets = [0, 32], sizes = [16, 32], strides = [1, 1]} : vector<16x96xf32> to vector<16x32xf32>
    %7 = vector.extract_strided_slice %4 {offsets = [0, 64], sizes = [16, 32], strides = [1, 1]} : vector<16x96xf32> to vector<16x32xf32>
    %8 = vector.extract_strided_slice %5 {offsets = [0, 0], sizes = [8, 32], strides = [1, 1]} : vector<16x32xf32> to vector<8x32xf32>
    %9 = vector.extract_strided_slice %6 {offsets = [0, 0], sizes = [8, 32], strides = [1, 1]} : vector<16x32xf32> to vector<8x32xf32>
    %10 = vector.extract_strided_slice %7 {offsets = [0, 0], sizes = [8, 32], strides = [1, 1]} : vector<16x32xf32> to vector<8x32xf32>
    %11 = vector.extract_strided_slice %8 {offsets = [7, 0], sizes = [1, 32], strides = [1, 1]} : vector<8x32xf32> to vector<1x32xf32>
    %12 = vector.extract_strided_slice %8 {offsets = [0, 0], sizes = [7, 32], strides = [1, 1]} : vector<8x32xf32> to vector<7x32xf32>
    %13 = tpu.concatenate %11, %12 in 0 : vector<1x32xf32>, vector<7x32xf32> -> vector<8x32xf32>
    %14 = vector.extract_strided_slice %10 {offsets = [1, 0], sizes = [7, 32], strides = [1, 1]} : vector<8x32xf32> to vector<7x32xf32>
    %15 = vector.extract_strided_slice %10 {offsets = [0, 0], sizes = [1, 32], strides = [1, 1]} : vector<8x32xf32> to vector<1x32xf32>
    %16 = tpu.concatenate %14, %15 in 0 : vector<7x32xf32>, vector<1x32xf32> -> vector<8x32xf32>
    %17 = arith.addf %13, %9 : vector<8x32xf32>
    %18 = arith.addf %17, %16 : vector<8x32xf32>
    %19 = vector.extract_strided_slice %5 {offsets = [8, 0], sizes = [8, 32], strides = [1, 1]} : vector<16x32xf32> to vector<8x32xf32>
    %20 = vector.extract_strided_slice %6 {offsets = [8, 0], sizes = [8, 32], strides = [1, 1]} : vector<16x32xf32> to vector<8x32xf32>
    %21 = vector.extract_strided_slice %7 {offsets = [8, 0], sizes = [8, 32], strides = [1, 1]} : vector<16x32xf32> to vector<8x32xf32>
    %22 = vector.extract_strided_slice %19 {offsets = [7, 0], sizes = [1, 32], strides = [1, 1]} : vector<8x32xf32> to vector<1x32xf32>
    %23 = vector.extract_strided_slice %19 {offsets = [0, 0], sizes = [7, 32], strides = [1, 1]} : vector<8x32xf32> to vector<7x32xf32>
    %24 = tpu.concatenate %22, %23 in 0 : vector<1x32xf32>, vector<7x32xf32> -> vector<8x32xf32>
    %25 = vector.extract_strided_slice %21 {offsets = [1, 0], sizes = [7, 32], strides = [1, 1]} : vector<8x32xf32> to vector<7x32xf32>
    %26 = vector.extract_strided_slice %21 {offsets = [0, 0], sizes = [1, 32], strides = [1, 1]} : vector<8x32xf32> to vector<1x32xf32>
    %27 = tpu.concatenate %25, %26 in 0 : vector<7x32xf32>, vector<1x32xf32> -> vector<8x32xf32>
    %28 = arith.addf %24, %20 : vector<8x32xf32>
    %29 = arith.addf %28, %27 : vector<8x32xf32>
    %30 = tpu.concatenate %18, %29 in 0 : vector<8x32xf32>, vector<8x32xf32> -> vector<16x32xf32>
    %c0_3 = arith.constant 0 : index
    %c0_4 = arith.constant 0 : index
    %31 = vector.load %arg3[%c0_3, %c0_4] : memref<16x4xf32, #tpu.memory_space<vmem>>, vector<16x4xf32>
    %c0_5 = arith.constant 0 : index
    %c0_6 = arith.constant 0 : index
    %32 = vector.load %arg5[%c0_5, %c0_6] : memref<4x32xf32, #tpu.memory_space<vmem>>, vector<4x32xf32>
    %33 = arith.truncf %31 : vector<16x4xf32> to vector<16x4xbf16>
    %34 = arith.truncf %32 : vector<4x32xf32> to vector<4x32xbf16>
    %cst_7 = arith.constant dense<0.000000e+00> : vector<16x32xf32>
    %35 = tpu.matmul %33, %34, %cst_7 {dimension_numbers = #tpu.dot_dimension_numbers<[1], [0], [0], [1], [0, 0, 1, 1], [], []>} : vector<16x4xbf16>, vector<4x32xbf16>, vector<16x32xf32> -> vector<16x32xf32>
    %36 = tpu.iota {dimensions = array<i32: 0>} : vector<8x1xi32>
    %c0_8 = arith.constant 0 : index
    %37 = memref.load %arg1[%c0_8] : memref<2xi32, #tpu.memory_space<smem>>
    %38 = vector.broadcast %37 : i32 to vector<8x1xi32>
    %39 = arith.cmpi slt, %36, %38 : vector<8x1xi32>
    %c0_9 = arith.constant 0 : index
    %c0_10 = arith.constant 0 : index
    %40 = vector.load %arg6[%c0_9, %c0_10] : memref<8x32xf32, #tpu.memory_space<vmem>>, vector<8x32xf32>
    %cst_11 = arith.constant 0.000000e+00 : f32
    %41 = vector.shape_cast %39 : vector<8x1xi1> to vector<8x1xi1>
    %42 = vector.broadcast %41 : vector<8x1xi1> to vector<8x32xi1>
    %43 = vector.broadcast %cst_11 : f32 to vector<8x32xf32>
    %44 = arith.select %42, %40, %43 : vector<8x32xi1>, vector<8x32xf32>
    %c1 = arith.constant 1 : index
    %45 = memref.load %arg1[%c1] : memref<2xi32, #tpu.memory_space<smem>>
    %46 = vector.broadcast %45 : i32 to vector<8x1xi32>
    %47 = arith.cmpi slt, %36, %46 : vector<8x1xi32>
    %c0_12 = arith.constant 0 : index
    %c0_13 = arith.constant 0 : index
    %48 = vector.load %arg6[%c0_12, %c0_13] : memref<8x32xf32, #tpu.memory_space<vmem>>, vector<8x32xf32>
    %cst_14 = arith.constant 0.000000e+00 : f32
    %49 = vector.shape_cast %47 : vector<8x1xi1> to vector<8x1xi1>
    %50 = vector.broadcast %49 : vector<8x1xi1> to vector<8x32xi1>
    %51 = vector.broadcast %cst_14 : f32 to vector<8x32xf32>
    %52 = arith.select %50, %48, %51 : vector<8x32xi1>, vector<8x32xf32>
    %53 = tpu.concatenate %44, %52 in 0 : vector<8x32xf32>, vector<8x32xf32> -> vector<16x32xf32>
    %54 = arith.addf %30, %35 : vector<16x32xf32>
    %55 = arith.addf %54, %53 : vector<16x32xf32>
    %c0_15 = arith.constant 0 : index
    %c0_16 = arith.constant 0 : index
    %56 = vector.load %arg7[%c0_15, %c0_16] : memref<32x128xf32, #tpu.memory_space<vmem>>, vector<32x128xf32>
    %57 = arith.truncf %55 : vector<16x32xf32> to vector<16x32xbf16>
    %58 = arith.truncf %56 : vector<32x128xf32> to vector<32x128xbf16>
    %cst_17 = arith.constant dense<0.000000e+00> : vector<16x128xf32>
    %59 = tpu.matmul %57, %58, %cst_17 {dimension_numbers = #tpu.dot_dimension_numbers<[1], [0], [0], [1], [0, 0, 1, 1], [], []>} : vector<16x32xbf16>, vector<32x128xbf16>, vector<16x128xf32> -> vector<16x128xf32>
    %60 = vector.extract_strided_slice %59 {offsets = [0, 0], sizes = [16, 64], strides = [1, 1]} : vector<16x128xf32> to vector<16x64xf32>
    %61 = vector.extract_strided_slice %59 {offsets = [0, 64], sizes = [16, 64], strides = [1, 1]} : vector<16x128xf32> to vector<16x64xf32>
    %62 = vector.extract_strided_slice %60 {offsets = [0, 0], sizes = [8, 64], strides = [1, 1]} : vector<16x64xf32> to vector<8x64xf32>
    %cst_18 = arith.constant 0.000000e+00 : f32
    %63 = vector.broadcast %cst_18 : f32 to vector<8x64xf32>
    %c0_19 = arith.constant 0 : index
    %c0_20 = arith.constant 0 : index
    %64 = vector.load %arg9[%c0_19, %c0_20] : memref<1x64xf32, #tpu.memory_space<vmem>>, vector<1x64xf32>
    %65 = vector.broadcast %64 : vector<1x64xf32> to vector<8x64xf32>
    %66 = arith.addf %63, %65 : vector<8x64xf32>
    %cst_21 = arith.constant 0.000000e+00 : f32
    %67 = vector.broadcast %cst_21 : f32 to vector<3x64xf32>
    %68 = vector.extract_strided_slice %62 {offsets = [0, 0], sizes = [5, 64], strides = [1, 1]} : vector<8x64xf32> to vector<5x64xf32>
    %69 = tpu.concatenate %67, %68 in 0 : vector<3x64xf32>, vector<5x64xf32> -> vector<8x64xf32>
    %c0_22 = arith.constant 0 : index
    %c0_23 = arith.constant 0 : index
    %70 = vector.load %arg8[%c0_22, %c0_23] : memref<4x64xf32, #tpu.memory_space<vmem>>, vector<1x64xf32>
    %71 = vector.broadcast %70 : vector<1x64xf32> to vector<8x64xf32>
    %72 = arith.mulf %69, %71 : vector<8x64xf32>
    %73 = arith.addf %66, %72 : vector<8x64xf32>
    %cst_24 = arith.constant 0.000000e+00 : f32
    %74 = vector.broadcast %cst_24 : f32 to vector<2x64xf32>
    %75 = vector.extract_strided_slice %62 {offsets = [0, 0], sizes = [6, 64], strides = [1, 1]} : vector<8x64xf32> to vector<6x64xf32>
    %76 = tpu.concatenate %74, %75 in 0 : vector<2x64xf32>, vector<6x64xf32> -> vector<8x64xf32>
    %c1_25 = arith.constant 1 : index
    %c0_26 = arith.constant 0 : index
    %77 = vector.load %arg8[%c1_25, %c0_26] : memref<4x64xf32, #tpu.memory_space<vmem>>, vector<1x64xf32>
    %78 = vector.broadcast %77 : vector<1x64xf32> to vector<8x64xf32>
    %79 = arith.mulf %76, %78 : vector<8x64xf32>
    %80 = arith.addf %73, %79 : vector<8x64xf32>
    %cst_27 = arith.constant 0.000000e+00 : f32
    %81 = vector.broadcast %cst_27 : f32 to vector<1x64xf32>
    %82 = vector.extract_strided_slice %62 {offsets = [0, 0], sizes = [7, 64], strides = [1, 1]} : vector<8x64xf32> to vector<7x64xf32>
    %83 = tpu.concatenate %81, %82 in 0 : vector<1x64xf32>, vector<7x64xf32> -> vector<8x64xf32>
    %c2 = arith.constant 2 : index
    %c0_28 = arith.constant 0 : index
    %84 = vector.load %arg8[%c2, %c0_28] : memref<4x64xf32, #tpu.memory_space<vmem>>, vector<1x64xf32>
    %85 = vector.broadcast %84 : vector<1x64xf32> to vector<8x64xf32>
    %86 = arith.mulf %83, %85 : vector<8x64xf32>
    %87 = arith.addf %80, %86 : vector<8x64xf32>
    %c3 = arith.constant 3 : index
    %c0_29 = arith.constant 0 : index
    %88 = vector.load %arg8[%c3, %c0_29] : memref<4x64xf32, #tpu.memory_space<vmem>>, vector<1x64xf32>
    %89 = vector.broadcast %88 : vector<1x64xf32> to vector<8x64xf32>
    %90 = arith.mulf %62, %89 : vector<8x64xf32>
    %91 = arith.addf %87, %90 : vector<8x64xf32>
    %92 = vector.extract_strided_slice %60 {offsets = [8, 0], sizes = [8, 64], strides = [1, 1]} : vector<16x64xf32> to vector<8x64xf32>
    %cst_30 = arith.constant 0.000000e+00 : f32
    %93 = vector.broadcast %cst_30 : f32 to vector<8x64xf32>
    %c0_31 = arith.constant 0 : index
    %c0_32 = arith.constant 0 : index
    %94 = vector.load %arg9[%c0_31, %c0_32] : memref<1x64xf32, #tpu.memory_space<vmem>>, vector<1x64xf32>
    %95 = vector.broadcast %94 : vector<1x64xf32> to vector<8x64xf32>
    %96 = arith.addf %93, %95 : vector<8x64xf32>
    %cst_33 = arith.constant 0.000000e+00 : f32
    %97 = vector.broadcast %cst_33 : f32 to vector<3x64xf32>
    %98 = vector.extract_strided_slice %92 {offsets = [0, 0], sizes = [5, 64], strides = [1, 1]} : vector<8x64xf32> to vector<5x64xf32>
    %99 = tpu.concatenate %97, %98 in 0 : vector<3x64xf32>, vector<5x64xf32> -> vector<8x64xf32>
    %c0_34 = arith.constant 0 : index
    %c0_35 = arith.constant 0 : index
    %100 = vector.load %arg8[%c0_34, %c0_35] : memref<4x64xf32, #tpu.memory_space<vmem>>, vector<1x64xf32>
    %101 = vector.broadcast %100 : vector<1x64xf32> to vector<8x64xf32>
    %102 = arith.mulf %99, %101 : vector<8x64xf32>
    %103 = arith.addf %96, %102 : vector<8x64xf32>
    %cst_36 = arith.constant 0.000000e+00 : f32
    %104 = vector.broadcast %cst_36 : f32 to vector<2x64xf32>
    %105 = vector.extract_strided_slice %92 {offsets = [0, 0], sizes = [6, 64], strides = [1, 1]} : vector<8x64xf32> to vector<6x64xf32>
    %106 = tpu.concatenate %104, %105 in 0 : vector<2x64xf32>, vector<6x64xf32> -> vector<8x64xf32>
    %c1_37 = arith.constant 1 : index
    %c0_38 = arith.constant 0 : index
    %107 = vector.load %arg8[%c1_37, %c0_38] : memref<4x64xf32, #tpu.memory_space<vmem>>, vector<1x64xf32>
    %108 = vector.broadcast %107 : vector<1x64xf32> to vector<8x64xf32>
    %109 = arith.mulf %106, %108 : vector<8x64xf32>
    %110 = arith.addf %103, %109 : vector<8x64xf32>
    %cst_39 = arith.constant 0.000000e+00 : f32
    %111 = vector.broadcast %cst_39 : f32 to vector<1x64xf32>
    %112 = vector.extract_strided_slice %92 {offsets = [0, 0], sizes = [7, 64], strides = [1, 1]} : vector<8x64xf32> to vector<7x64xf32>
    %113 = tpu.concatenate %111, %112 in 0 : vector<1x64xf32>, vector<7x64xf32> -> vector<8x64xf32>
    %c2_40 = arith.constant 2 : index
    %c0_41 = arith.constant 0 : index
    %114 = vector.load %arg8[%c2_40, %c0_41] : memref<4x64xf32, #tpu.memory_space<vmem>>, vector<1x64xf32>
    %115 = vector.broadcast %114 : vector<1x64xf32> to vector<8x64xf32>
    %116 = arith.mulf %113, %115 : vector<8x64xf32>
    %117 = arith.addf %110, %116 : vector<8x64xf32>
    %c3_42 = arith.constant 3 : index
    %c0_43 = arith.constant 0 : index
    %118 = vector.load %arg8[%c3_42, %c0_43] : memref<4x64xf32, #tpu.memory_space<vmem>>, vector<1x64xf32>
    %119 = vector.broadcast %118 : vector<1x64xf32> to vector<8x64xf32>
    %120 = arith.mulf %92, %119 : vector<8x64xf32>
    %121 = arith.addf %117, %120 : vector<8x64xf32>
    %122 = tpu.concatenate %91, %121 in 0 : vector<8x64xf32>, vector<8x64xf32> -> vector<16x64xf32>
    %cst_44 = arith.constant 5.000000e-01 : f32
    %123 = vector.broadcast %cst_44 : f32 to vector<16x64xf32>
    %124 = arith.mulf %123, %122 : vector<16x64xf32>
    %125 = math.tanh %124 : vector<16x64xf32>
    %cst_45 = arith.constant 1.000000e+00 : f32
    %126 = vector.broadcast %cst_45 : f32 to vector<16x64xf32>
    %127 = arith.addf %125, %126 : vector<16x64xf32>
    %cst_46 = arith.constant 5.000000e-01 : f32
    %128 = vector.broadcast %cst_46 : f32 to vector<16x64xf32>
    %129 = arith.mulf %128, %127 : vector<16x64xf32>
    %130 = arith.mulf %122, %129 : vector<16x64xf32>
    %c0_47 = arith.constant 0 : index
    %c0_48 = arith.constant 0 : index
    %131 = vector.load %arg10[%c0_47, %c0_48] : memref<64x96xf32, #tpu.memory_space<vmem>>, vector<64x96xf32>
    %132 = arith.truncf %130 : vector<16x64xf32> to vector<16x64xbf16>
    %133 = arith.truncf %131 : vector<64x96xf32> to vector<64x96xbf16>
    %cst_49 = arith.constant dense<0.000000e+00> : vector<16x96xf32>
    %134 = tpu.matmul %132, %133, %cst_49 {dimension_numbers = #tpu.dot_dimension_numbers<[1], [0], [0], [1], [0, 0, 1, 1], [], []>} : vector<16x64xbf16>, vector<64x96xbf16>, vector<16x96xf32> -> vector<16x96xf32>
    %135 = vector.extract_strided_slice %134 {offsets = [0, 0], sizes = [16, 64], strides = [1, 1]} : vector<16x96xf32> to vector<16x64xf32>
    %c0_50 = arith.constant 0 : index
    %c0_51 = arith.constant 0 : index
    %136 = vector.load %arg11[%c0_50, %c0_51] : memref<1x64xf32, #tpu.memory_space<vmem>>, vector<1x64xf32>
    %137 = vector.broadcast %136 : vector<1x64xf32> to vector<16x64xf32>
    %138 = arith.addf %135, %137 : vector<16x64xf32>
    %cst_52 = arith.constant 0.000000e+00 : f32
    %139 = vector.broadcast %cst_52 : f32 to vector<16x64xf32>
    %140 = arith.maximumf %138, %139 : vector<16x64xf32>
    %141 = math.absf %138 : vector<16x64xf32>
    %cst_53 = arith.constant 0.000000e+00 : f32
    %142 = vector.broadcast %cst_53 : f32 to vector<16x64xf32>
    %143 = arith.subf %142, %141 : vector<16x64xf32>
    %144 = math.exp %143 : vector<16x64xf32>
    %145 = math.log1p %144 : vector<16x64xf32>
    %146 = arith.addf %140, %145 : vector<16x64xf32>
    %147 = vector.extract_strided_slice %134 {offsets = [0, 64], sizes = [16, 16], strides = [1, 1]} : vector<16x96xf32> to vector<16x16xf32>
    %148 = vector.extract_strided_slice %134 {offsets = [0, 80], sizes = [16, 16], strides = [1, 1]} : vector<16x96xf32> to vector<16x16xf32>
    %c0_54 = arith.constant 0 : index
    %c0_55 = arith.constant 0 : index
    %149 = vector.load %arg12[%c0_54, %c0_55] : memref<16x64xf32, #tpu.memory_space<vmem>>, vector<16x64xf32>
    %150 = math.exp %149 : vector<16x64xf32>
    %cst_56 = arith.constant 0.000000e+00 : f32
    %151 = vector.broadcast %cst_56 : f32 to vector<16x64xf32>
    %152 = arith.subf %151, %150 : vector<16x64xf32>
    %153 = arith.mulf %146, %130 : vector<16x64xf32>
    %154 = vector.shape_cast %147 : vector<16x16xf32> to vector<16x16x1xf32>
    %155 = vector.shape_cast %148 : vector<16x16xf32> to vector<16x16x1xf32>
    %cst_57 = arith.constant 0.000000e+00 : f32
    %156 = vector.broadcast %cst_57 : f32 to vector<16x64xf32>
    %157 = vector.extract_strided_slice %146 {offsets = [0, 0], sizes = [1, 64], strides = [1, 1]} : vector<16x64xf32> to vector<1x64xf32>
    %158 = vector.broadcast %157 : vector<1x64xf32> to vector<16x64xf32>
    %159 = arith.mulf %158, %152 : vector<16x64xf32>
    %160 = math.exp %159 : vector<16x64xf32>
    %161 = arith.mulf %160, %156 : vector<16x64xf32>
    %162 = vector.extract_strided_slice %153 {offsets = [0, 0], sizes = [1, 64], strides = [1, 1]} : vector<16x64xf32> to vector<1x64xf32>
    %163 = vector.extract_strided_slice %154 {offsets = [0, 0, 0], sizes = [1, 16, 1], strides = [1, 1, 1]} : vector<16x16x1xf32> to vector<1x16x1xf32>
    %164 = vector.shape_cast %163 : vector<1x16x1xf32> to vector<16x1xf32>
    %165 = vector.broadcast %162 : vector<1x64xf32> to vector<16x64xf32>
    %166 = vector.broadcast %164 : vector<16x1xf32> to vector<16x64xf32>
    %167 = arith.mulf %165, %166 : vector<16x64xf32>
    %168 = arith.addf %161, %167 : vector<16x64xf32>
    %169 = vector.extract_strided_slice %155 {offsets = [0, 0, 0], sizes = [1, 16, 1], strides = [1, 1, 1]} : vector<16x16x1xf32> to vector<1x16x1xf32>
    %170 = vector.shape_cast %169 : vector<1x16x1xf32> to vector<16x1xf32>
    %171 = vector.broadcast %170 : vector<16x1xf32> to vector<16x64xf32>
    %172 = arith.mulf %168, %171 : vector<16x64xf32>
    %cst_58 = arith.constant dense<0.000000e+00> : vector<64xf32>
    %173 = vector.multi_reduction <add>, %172, %cst_58 [0] : vector<16x64xf32> to vector<64xf32>
    %174 = vector.shape_cast %173 : vector<64xf32> to vector<1x64xf32>
    %175 = vector.extract_strided_slice %146 {offsets = [1, 0], sizes = [1, 64], strides = [1, 1]} : vector<16x64xf32> to vector<1x64xf32>
    %176 = vector.broadcast %175 : vector<1x64xf32> to vector<16x64xf32>
    %177 = arith.mulf %176, %152 : vector<16x64xf32>
    %178 = math.exp %177 : vector<16x64xf32>
    %179 = arith.mulf %178, %168 : vector<16x64xf32>
    %180 = vector.extract_strided_slice %153 {offsets = [1, 0], sizes = [1, 64], strides = [1, 1]} : vector<16x64xf32> to vector<1x64xf32>
    %181 = vector.extract_strided_slice %154 {offsets = [1, 0, 0], sizes = [1, 16, 1], strides = [1, 1, 1]} : vector<16x16x1xf32> to vector<1x16x1xf32>
    %182 = vector.shape_cast %181 : vector<1x16x1xf32> to vector<16x1xf32>
    %183 = vector.broadcast %180 : vector<1x64xf32> to vector<16x64xf32>
    %184 = vector.broadcast %182 : vector<16x1xf32> to vector<16x64xf32>
    %185 = arith.mulf %183, %184 : vector<16x64xf32>
    %186 = arith.addf %179, %185 : vector<16x64xf32>
    %187 = vector.extract_strided_slice %155 {offsets = [1, 0, 0], sizes = [1, 16, 1], strides = [1, 1, 1]} : vector<16x16x1xf32> to vector<1x16x1xf32>
    %188 = vector.shape_cast %187 : vector<1x16x1xf32> to vector<16x1xf32>
    %189 = vector.broadcast %188 : vector<16x1xf32> to vector<16x64xf32>
    %190 = arith.mulf %186, %189 : vector<16x64xf32>
    %cst_59 = arith.constant dense<0.000000e+00> : vector<64xf32>
    %191 = vector.multi_reduction <add>, %190, %cst_59 [0] : vector<16x64xf32> to vector<64xf32>
    %192 = vector.shape_cast %191 : vector<64xf32> to vector<1x64xf32>
    %193 = vector.extract_strided_slice %146 {offsets = [2, 0], sizes = [1, 64], strides = [1, 1]} : vector<16x64xf32> to vector<1x64xf32>
    %194 = vector.broadcast %193 : vector<1x64xf32> to vector<16x64xf32>
    %195 = arith.mulf %194, %152 : vector<16x64xf32>
    %196 = math.exp %195 : vector<16x64xf32>
    %197 = arith.mulf %196, %186 : vector<16x64xf32>
    %198 = vector.extract_strided_slice %153 {offsets = [2, 0], sizes = [1, 64], strides = [1, 1]} : vector<16x64xf32> to vector<1x64xf32>
    %199 = vector.extract_strided_slice %154 {offsets = [2, 0, 0], sizes = [1, 16, 1], strides = [1, 1, 1]} : vector<16x16x1xf32> to vector<1x16x1xf32>
    %200 = vector.shape_cast %199 : vector<1x16x1xf32> to vector<16x1xf32>
    %201 = vector.broadcast %198 : vector<1x64xf32> to vector<16x64xf32>
    %202 = vector.broadcast %200 : vector<16x1xf32> to vector<16x64xf32>
    %203 = arith.mulf %201, %202 : vector<16x64xf32>
    %204 = arith.addf %197, %203 : vector<16x64xf32>
    %205 = vector.extract_strided_slice %155 {offsets = [2, 0, 0], sizes = [1, 16, 1], strides = [1, 1, 1]} : vector<16x16x1xf32> to vector<1x16x1xf32>
    %206 = vector.shape_cast %205 : vector<1x16x1xf32> to vector<16x1xf32>
    %207 = vector.broadcast %206 : vector<16x1xf32> to vector<16x64xf32>
    %208 = arith.mulf %204, %207 : vector<16x64xf32>
    %cst_60 = arith.constant dense<0.000000e+00> : vector<64xf32>
    %209 = vector.multi_reduction <add>, %208, %cst_60 [0] : vector<16x64xf32> to vector<64xf32>
    %210 = vector.shape_cast %209 : vector<64xf32> to vector<1x64xf32>
    %211 = vector.extract_strided_slice %146 {offsets = [3, 0], sizes = [1, 64], strides = [1, 1]} : vector<16x64xf32> to vector<1x64xf32>
    %212 = vector.broadcast %211 : vector<1x64xf32> to vector<16x64xf32>
    %213 = arith.mulf %212, %152 : vector<16x64xf32>
    %214 = math.exp %213 : vector<16x64xf32>
    %215 = arith.mulf %214, %204 : vector<16x64xf32>
    %216 = vector.extract_strided_slice %153 {offsets = [3, 0], sizes = [1, 64], strides = [1, 1]} : vector<16x64xf32> to vector<1x64xf32>
    %217 = vector.extract_strided_slice %154 {offsets = [3, 0, 0], sizes = [1, 16, 1], strides = [1, 1, 1]} : vector<16x16x1xf32> to vector<1x16x1xf32>
    %218 = vector.shape_cast %217 : vector<1x16x1xf32> to vector<16x1xf32>
    %219 = vector.broadcast %216 : vector<1x64xf32> to vector<16x64xf32>
    %220 = vector.broadcast %218 : vector<16x1xf32> to vector<16x64xf32>
    %221 = arith.mulf %219, %220 : vector<16x64xf32>
    %222 = arith.addf %215, %221 : vector<16x64xf32>
    %223 = vector.extract_strided_slice %155 {offsets = [3, 0, 0], sizes = [1, 16, 1], strides = [1, 1, 1]} : vector<16x16x1xf32> to vector<1x16x1xf32>
    %224 = vector.shape_cast %223 : vector<1x16x1xf32> to vector<16x1xf32>
    %225 = vector.broadcast %224 : vector<16x1xf32> to vector<16x64xf32>
    %226 = arith.mulf %222, %225 : vector<16x64xf32>
    %cst_61 = arith.constant dense<0.000000e+00> : vector<64xf32>
    %227 = vector.multi_reduction <add>, %226, %cst_61 [0] : vector<16x64xf32> to vector<64xf32>
    %228 = vector.shape_cast %227 : vector<64xf32> to vector<1x64xf32>
    %229 = vector.extract_strided_slice %146 {offsets = [4, 0], sizes = [1, 64], strides = [1, 1]} : vector<16x64xf32> to vector<1x64xf32>
    %230 = vector.broadcast %229 : vector<1x64xf32> to vector<16x64xf32>
    %231 = arith.mulf %230, %152 : vector<16x64xf32>
    %232 = math.exp %231 : vector<16x64xf32>
    %233 = arith.mulf %232, %222 : vector<16x64xf32>
    %234 = vector.extract_strided_slice %153 {offsets = [4, 0], sizes = [1, 64], strides = [1, 1]} : vector<16x64xf32> to vector<1x64xf32>
    %235 = vector.extract_strided_slice %154 {offsets = [4, 0, 0], sizes = [1, 16, 1], strides = [1, 1, 1]} : vector<16x16x1xf32> to vector<1x16x1xf32>
    %236 = vector.shape_cast %235 : vector<1x16x1xf32> to vector<16x1xf32>
    %237 = vector.broadcast %234 : vector<1x64xf32> to vector<16x64xf32>
    %238 = vector.broadcast %236 : vector<16x1xf32> to vector<16x64xf32>
    %239 = arith.mulf %237, %238 : vector<16x64xf32>
    %240 = arith.addf %233, %239 : vector<16x64xf32>
    %241 = vector.extract_strided_slice %155 {offsets = [4, 0, 0], sizes = [1, 16, 1], strides = [1, 1, 1]} : vector<16x16x1xf32> to vector<1x16x1xf32>
    %242 = vector.shape_cast %241 : vector<1x16x1xf32> to vector<16x1xf32>
    %243 = vector.broadcast %242 : vector<16x1xf32> to vector<16x64xf32>
    %244 = arith.mulf %240, %243 : vector<16x64xf32>
    %cst_62 = arith.constant dense<0.000000e+00> : vector<64xf32>
    %245 = vector.multi_reduction <add>, %244, %cst_62 [0] : vector<16x64xf32> to vector<64xf32>
    %246 = vector.shape_cast %245 : vector<64xf32> to vector<1x64xf32>
    %247 = vector.extract_strided_slice %146 {offsets = [5, 0], sizes = [1, 64], strides = [1, 1]} : vector<16x64xf32> to vector<1x64xf32>
    %248 = vector.broadcast %247 : vector<1x64xf32> to vector<16x64xf32>
    %249 = arith.mulf %248, %152 : vector<16x64xf32>
    %250 = math.exp %249 : vector<16x64xf32>
    %251 = arith.mulf %250, %240 : vector<16x64xf32>
    %252 = vector.extract_strided_slice %153 {offsets = [5, 0], sizes = [1, 64], strides = [1, 1]} : vector<16x64xf32> to vector<1x64xf32>
    %253 = vector.extract_strided_slice %154 {offsets = [5, 0, 0], sizes = [1, 16, 1], strides = [1, 1, 1]} : vector<16x16x1xf32> to vector<1x16x1xf32>
    %254 = vector.shape_cast %253 : vector<1x16x1xf32> to vector<16x1xf32>
    %255 = vector.broadcast %252 : vector<1x64xf32> to vector<16x64xf32>
    %256 = vector.broadcast %254 : vector<16x1xf32> to vector<16x64xf32>
    %257 = arith.mulf %255, %256 : vector<16x64xf32>
    %258 = arith.addf %251, %257 : vector<16x64xf32>
    %259 = vector.extract_strided_slice %155 {offsets = [5, 0, 0], sizes = [1, 16, 1], strides = [1, 1, 1]} : vector<16x16x1xf32> to vector<1x16x1xf32>
    %260 = vector.shape_cast %259 : vector<1x16x1xf32> to vector<16x1xf32>
    %261 = vector.broadcast %260 : vector<16x1xf32> to vector<16x64xf32>
    %262 = arith.mulf %258, %261 : vector<16x64xf32>
    %cst_63 = arith.constant dense<0.000000e+00> : vector<64xf32>
    %263 = vector.multi_reduction <add>, %262, %cst_63 [0] : vector<16x64xf32> to vector<64xf32>
    %264 = vector.shape_cast %263 : vector<64xf32> to vector<1x64xf32>
    %265 = vector.extract_strided_slice %146 {offsets = [6, 0], sizes = [1, 64], strides = [1, 1]} : vector<16x64xf32> to vector<1x64xf32>
    %266 = vector.broadcast %265 : vector<1x64xf32> to vector<16x64xf32>
    %267 = arith.mulf %266, %152 : vector<16x64xf32>
    %268 = math.exp %267 : vector<16x64xf32>
    %269 = arith.mulf %268, %258 : vector<16x64xf32>
    %270 = vector.extract_strided_slice %153 {offsets = [6, 0], sizes = [1, 64], strides = [1, 1]} : vector<16x64xf32> to vector<1x64xf32>
    %271 = vector.extract_strided_slice %154 {offsets = [6, 0, 0], sizes = [1, 16, 1], strides = [1, 1, 1]} : vector<16x16x1xf32> to vector<1x16x1xf32>
    %272 = vector.shape_cast %271 : vector<1x16x1xf32> to vector<16x1xf32>
    %273 = vector.broadcast %270 : vector<1x64xf32> to vector<16x64xf32>
    %274 = vector.broadcast %272 : vector<16x1xf32> to vector<16x64xf32>
    %275 = arith.mulf %273, %274 : vector<16x64xf32>
    %276 = arith.addf %269, %275 : vector<16x64xf32>
    %277 = vector.extract_strided_slice %155 {offsets = [6, 0, 0], sizes = [1, 16, 1], strides = [1, 1, 1]} : vector<16x16x1xf32> to vector<1x16x1xf32>
    %278 = vector.shape_cast %277 : vector<1x16x1xf32> to vector<16x1xf32>
    %279 = vector.broadcast %278 : vector<16x1xf32> to vector<16x64xf32>
    %280 = arith.mulf %276, %279 : vector<16x64xf32>
    %cst_64 = arith.constant dense<0.000000e+00> : vector<64xf32>
    %281 = vector.multi_reduction <add>, %280, %cst_64 [0] : vector<16x64xf32> to vector<64xf32>
    %282 = vector.shape_cast %281 : vector<64xf32> to vector<1x64xf32>
    %283 = vector.extract_strided_slice %146 {offsets = [7, 0], sizes = [1, 64], strides = [1, 1]} : vector<16x64xf32> to vector<1x64xf32>
    %284 = vector.broadcast %283 : vector<1x64xf32> to vector<16x64xf32>
    %285 = arith.mulf %284, %152 : vector<16x64xf32>
    %286 = math.exp %285 : vector<16x64xf32>
    %287 = arith.mulf %286, %276 : vector<16x64xf32>
    %288 = vector.extract_strided_slice %153 {offsets = [7, 0], sizes = [1, 64], strides = [1, 1]} : vector<16x64xf32> to vector<1x64xf32>
    %289 = vector.extract_strided_slice %154 {offsets = [7, 0, 0], sizes = [1, 16, 1], strides = [1, 1, 1]} : vector<16x16x1xf32> to vector<1x16x1xf32>
    %290 = vector.shape_cast %289 : vector<1x16x1xf32> to vector<16x1xf32>
    %291 = vector.broadcast %288 : vector<1x64xf32> to vector<16x64xf32>
    %292 = vector.broadcast %290 : vector<16x1xf32> to vector<16x64xf32>
    %293 = arith.mulf %291, %292 : vector<16x64xf32>
    %294 = arith.addf %287, %293 : vector<16x64xf32>
    %295 = vector.extract_strided_slice %155 {offsets = [7, 0, 0], sizes = [1, 16, 1], strides = [1, 1, 1]} : vector<16x16x1xf32> to vector<1x16x1xf32>
    %296 = vector.shape_cast %295 : vector<1x16x1xf32> to vector<16x1xf32>
    %297 = vector.broadcast %296 : vector<16x1xf32> to vector<16x64xf32>
    %298 = arith.mulf %294, %297 : vector<16x64xf32>
    %cst_65 = arith.constant dense<0.000000e+00> : vector<64xf32>
    %299 = vector.multi_reduction <add>, %298, %cst_65 [0] : vector<16x64xf32> to vector<64xf32>
    %300 = vector.shape_cast %299 : vector<64xf32> to vector<1x64xf32>
    %301 = tpu.concatenate %174, %192, %210, %228, %246, %264, %282, %300 in 0 : vector<1x64xf32>, vector<1x64xf32>, vector<1x64xf32>, vector<1x64xf32>, vector<1x64xf32>, vector<1x64xf32>, vector<1x64xf32>, vector<1x64xf32> -> vector<8x64xf32>
    %cst_66 = arith.constant 0.000000e+00 : f32
    %302 = vector.broadcast %cst_66 : f32 to vector<16x64xf32>
    %303 = vector.extract_strided_slice %146 {offsets = [8, 0], sizes = [1, 64], strides = [1, 1]} : vector<16x64xf32> to vector<1x64xf32>
    %304 = vector.broadcast %303 : vector<1x64xf32> to vector<16x64xf32>
    %305 = arith.mulf %304, %152 : vector<16x64xf32>
    %306 = math.exp %305 : vector<16x64xf32>
    %307 = arith.mulf %306, %302 : vector<16x64xf32>
    %308 = vector.extract_strided_slice %153 {offsets = [8, 0], sizes = [1, 64], strides = [1, 1]} : vector<16x64xf32> to vector<1x64xf32>
    %309 = vector.extract_strided_slice %154 {offsets = [8, 0, 0], sizes = [1, 16, 1], strides = [1, 1, 1]} : vector<16x16x1xf32> to vector<1x16x1xf32>
    %310 = vector.shape_cast %309 : vector<1x16x1xf32> to vector<16x1xf32>
    %311 = vector.broadcast %308 : vector<1x64xf32> to vector<16x64xf32>
    %312 = vector.broadcast %310 : vector<16x1xf32> to vector<16x64xf32>
    %313 = arith.mulf %311, %312 : vector<16x64xf32>
    %314 = arith.addf %307, %313 : vector<16x64xf32>
    %315 = vector.extract_strided_slice %155 {offsets = [8, 0, 0], sizes = [1, 16, 1], strides = [1, 1, 1]} : vector<16x16x1xf32> to vector<1x16x1xf32>
    %316 = vector.shape_cast %315 : vector<1x16x1xf32> to vector<16x1xf32>
    %317 = vector.broadcast %316 : vector<16x1xf32> to vector<16x64xf32>
    %318 = arith.mulf %314, %317 : vector<16x64xf32>
    %cst_67 = arith.constant dense<0.000000e+00> : vector<64xf32>
    %319 = vector.multi_reduction <add>, %318, %cst_67 [0] : vector<16x64xf32> to vector<64xf32>
    %320 = vector.shape_cast %319 : vector<64xf32> to vector<1x64xf32>
    %321 = vector.extract_strided_slice %146 {offsets = [9, 0], sizes = [1, 64], strides = [1, 1]} : vector<16x64xf32> to vector<1x64xf32>
    %322 = vector.broadcast %321 : vector<1x64xf32> to vector<16x64xf32>
    %323 = arith.mulf %322, %152 : vector<16x64xf32>
    %324 = math.exp %323 : vector<16x64xf32>
    %325 = arith.mulf %324, %314 : vector<16x64xf32>
    %326 = vector.extract_strided_slice %153 {offsets = [9, 0], sizes = [1, 64], strides = [1, 1]} : vector<16x64xf32> to vector<1x64xf32>
    %327 = vector.extract_strided_slice %154 {offsets = [9, 0, 0], sizes = [1, 16, 1], strides = [1, 1, 1]} : vector<16x16x1xf32> to vector<1x16x1xf32>
    %328 = vector.shape_cast %327 : vector<1x16x1xf32> to vector<16x1xf32>
    %329 = vector.broadcast %326 : vector<1x64xf32> to vector<16x64xf32>
    %330 = vector.broadcast %328 : vector<16x1xf32> to vector<16x64xf32>
    %331 = arith.mulf %329, %330 : vector<16x64xf32>
    %332 = arith.addf %325, %331 : vector<16x64xf32>
    %333 = vector.extract_strided_slice %155 {offsets = [9, 0, 0], sizes = [1, 16, 1], strides = [1, 1, 1]} : vector<16x16x1xf32> to vector<1x16x1xf32>
    %334 = vector.shape_cast %333 : vector<1x16x1xf32> to vector<16x1xf32>
    %335 = vector.broadcast %334 : vector<16x1xf32> to vector<16x64xf32>
    %336 = arith.mulf %332, %335 : vector<16x64xf32>
    %cst_68 = arith.constant dense<0.000000e+00> : vector<64xf32>
    %337 = vector.multi_reduction <add>, %336, %cst_68 [0] : vector<16x64xf32> to vector<64xf32>
    %338 = vector.shape_cast %337 : vector<64xf32> to vector<1x64xf32>
    %339 = vector.extract_strided_slice %146 {offsets = [10, 0], sizes = [1, 64], strides = [1, 1]} : vector<16x64xf32> to vector<1x64xf32>
    %340 = vector.broadcast %339 : vector<1x64xf32> to vector<16x64xf32>
    %341 = arith.mulf %340, %152 : vector<16x64xf32>
    %342 = math.exp %341 : vector<16x64xf32>
    %343 = arith.mulf %342, %332 : vector<16x64xf32>
    %344 = vector.extract_strided_slice %153 {offsets = [10, 0], sizes = [1, 64], strides = [1, 1]} : vector<16x64xf32> to vector<1x64xf32>
    %345 = vector.extract_strided_slice %154 {offsets = [10, 0, 0], sizes = [1, 16, 1], strides = [1, 1, 1]} : vector<16x16x1xf32> to vector<1x16x1xf32>
    %346 = vector.shape_cast %345 : vector<1x16x1xf32> to vector<16x1xf32>
    %347 = vector.broadcast %344 : vector<1x64xf32> to vector<16x64xf32>
    %348 = vector.broadcast %346 : vector<16x1xf32> to vector<16x64xf32>
    %349 = arith.mulf %347, %348 : vector<16x64xf32>
    %350 = arith.addf %343, %349 : vector<16x64xf32>
    %351 = vector.extract_strided_slice %155 {offsets = [10, 0, 0], sizes = [1, 16, 1], strides = [1, 1, 1]} : vector<16x16x1xf32> to vector<1x16x1xf32>
    %352 = vector.shape_cast %351 : vector<1x16x1xf32> to vector<16x1xf32>
    %353 = vector.broadcast %352 : vector<16x1xf32> to vector<16x64xf32>
    %354 = arith.mulf %350, %353 : vector<16x64xf32>
    %cst_69 = arith.constant dense<0.000000e+00> : vector<64xf32>
    %355 = vector.multi_reduction <add>, %354, %cst_69 [0] : vector<16x64xf32> to vector<64xf32>
    %356 = vector.shape_cast %355 : vector<64xf32> to vector<1x64xf32>
    %357 = vector.extract_strided_slice %146 {offsets = [11, 0], sizes = [1, 64], strides = [1, 1]} : vector<16x64xf32> to vector<1x64xf32>
    %358 = vector.broadcast %357 : vector<1x64xf32> to vector<16x64xf32>
    %359 = arith.mulf %358, %152 : vector<16x64xf32>
    %360 = math.exp %359 : vector<16x64xf32>
    %361 = arith.mulf %360, %350 : vector<16x64xf32>
    %362 = vector.extract_strided_slice %153 {offsets = [11, 0], sizes = [1, 64], strides = [1, 1]} : vector<16x64xf32> to vector<1x64xf32>
    %363 = vector.extract_strided_slice %154 {offsets = [11, 0, 0], sizes = [1, 16, 1], strides = [1, 1, 1]} : vector<16x16x1xf32> to vector<1x16x1xf32>
    %364 = vector.shape_cast %363 : vector<1x16x1xf32> to vector<16x1xf32>
    %365 = vector.broadcast %362 : vector<1x64xf32> to vector<16x64xf32>
    %366 = vector.broadcast %364 : vector<16x1xf32> to vector<16x64xf32>
    %367 = arith.mulf %365, %366 : vector<16x64xf32>
    %368 = arith.addf %361, %367 : vector<16x64xf32>
    %369 = vector.extract_strided_slice %155 {offsets = [11, 0, 0], sizes = [1, 16, 1], strides = [1, 1, 1]} : vector<16x16x1xf32> to vector<1x16x1xf32>
    %370 = vector.shape_cast %369 : vector<1x16x1xf32> to vector<16x1xf32>
    %371 = vector.broadcast %370 : vector<16x1xf32> to vector<16x64xf32>
    %372 = arith.mulf %368, %371 : vector<16x64xf32>
    %cst_70 = arith.constant dense<0.000000e+00> : vector<64xf32>
    %373 = vector.multi_reduction <add>, %372, %cst_70 [0] : vector<16x64xf32> to vector<64xf32>
    %374 = vector.shape_cast %373 : vector<64xf32> to vector<1x64xf32>
    %375 = vector.extract_strided_slice %146 {offsets = [12, 0], sizes = [1, 64], strides = [1, 1]} : vector<16x64xf32> to vector<1x64xf32>
    %376 = vector.broadcast %375 : vector<1x64xf32> to vector<16x64xf32>
    %377 = arith.mulf %376, %152 : vector<16x64xf32>
    %378 = math.exp %377 : vector<16x64xf32>
    %379 = arith.mulf %378, %368 : vector<16x64xf32>
    %380 = vector.extract_strided_slice %153 {offsets = [12, 0], sizes = [1, 64], strides = [1, 1]} : vector<16x64xf32> to vector<1x64xf32>
    %381 = vector.extract_strided_slice %154 {offsets = [12, 0, 0], sizes = [1, 16, 1], strides = [1, 1, 1]} : vector<16x16x1xf32> to vector<1x16x1xf32>
    %382 = vector.shape_cast %381 : vector<1x16x1xf32> to vector<16x1xf32>
    %383 = vector.broadcast %380 : vector<1x64xf32> to vector<16x64xf32>
    %384 = vector.broadcast %382 : vector<16x1xf32> to vector<16x64xf32>
    %385 = arith.mulf %383, %384 : vector<16x64xf32>
    %386 = arith.addf %379, %385 : vector<16x64xf32>
    %387 = vector.extract_strided_slice %155 {offsets = [12, 0, 0], sizes = [1, 16, 1], strides = [1, 1, 1]} : vector<16x16x1xf32> to vector<1x16x1xf32>
    %388 = vector.shape_cast %387 : vector<1x16x1xf32> to vector<16x1xf32>
    %389 = vector.broadcast %388 : vector<16x1xf32> to vector<16x64xf32>
    %390 = arith.mulf %386, %389 : vector<16x64xf32>
    %cst_71 = arith.constant dense<0.000000e+00> : vector<64xf32>
    %391 = vector.multi_reduction <add>, %390, %cst_71 [0] : vector<16x64xf32> to vector<64xf32>
    %392 = vector.shape_cast %391 : vector<64xf32> to vector<1x64xf32>
    %393 = vector.extract_strided_slice %146 {offsets = [13, 0], sizes = [1, 64], strides = [1, 1]} : vector<16x64xf32> to vector<1x64xf32>
    %394 = vector.broadcast %393 : vector<1x64xf32> to vector<16x64xf32>
    %395 = arith.mulf %394, %152 : vector<16x64xf32>
    %396 = math.exp %395 : vector<16x64xf32>
    %397 = arith.mulf %396, %386 : vector<16x64xf32>
    %398 = vector.extract_strided_slice %153 {offsets = [13, 0], sizes = [1, 64], strides = [1, 1]} : vector<16x64xf32> to vector<1x64xf32>
    %399 = vector.extract_strided_slice %154 {offsets = [13, 0, 0], sizes = [1, 16, 1], strides = [1, 1, 1]} : vector<16x16x1xf32> to vector<1x16x1xf32>
    %400 = vector.shape_cast %399 : vector<1x16x1xf32> to vector<16x1xf32>
    %401 = vector.broadcast %398 : vector<1x64xf32> to vector<16x64xf32>
    %402 = vector.broadcast %400 : vector<16x1xf32> to vector<16x64xf32>
    %403 = arith.mulf %401, %402 : vector<16x64xf32>
    %404 = arith.addf %397, %403 : vector<16x64xf32>
    %405 = vector.extract_strided_slice %155 {offsets = [13, 0, 0], sizes = [1, 16, 1], strides = [1, 1, 1]} : vector<16x16x1xf32> to vector<1x16x1xf32>
    %406 = vector.shape_cast %405 : vector<1x16x1xf32> to vector<16x1xf32>
    %407 = vector.broadcast %406 : vector<16x1xf32> to vector<16x64xf32>
    %408 = arith.mulf %404, %407 : vector<16x64xf32>
    %cst_72 = arith.constant dense<0.000000e+00> : vector<64xf32>
    %409 = vector.multi_reduction <add>, %408, %cst_72 [0] : vector<16x64xf32> to vector<64xf32>
    %410 = vector.shape_cast %409 : vector<64xf32> to vector<1x64xf32>
    %411 = vector.extract_strided_slice %146 {offsets = [14, 0], sizes = [1, 64], strides = [1, 1]} : vector<16x64xf32> to vector<1x64xf32>
    %412 = vector.broadcast %411 : vector<1x64xf32> to vector<16x64xf32>
    %413 = arith.mulf %412, %152 : vector<16x64xf32>
    %414 = math.exp %413 : vector<16x64xf32>
    %415 = arith.mulf %414, %404 : vector<16x64xf32>
    %416 = vector.extract_strided_slice %153 {offsets = [14, 0], sizes = [1, 64], strides = [1, 1]} : vector<16x64xf32> to vector<1x64xf32>
    %417 = vector.extract_strided_slice %154 {offsets = [14, 0, 0], sizes = [1, 16, 1], strides = [1, 1, 1]} : vector<16x16x1xf32> to vector<1x16x1xf32>
    %418 = vector.shape_cast %417 : vector<1x16x1xf32> to vector<16x1xf32>
    %419 = vector.broadcast %416 : vector<1x64xf32> to vector<16x64xf32>
    %420 = vector.broadcast %418 : vector<16x1xf32> to vector<16x64xf32>
    %421 = arith.mulf %419, %420 : vector<16x64xf32>
    %422 = arith.addf %415, %421 : vector<16x64xf32>
    %423 = vector.extract_strided_slice %155 {offsets = [14, 0, 0], sizes = [1, 16, 1], strides = [1, 1, 1]} : vector<16x16x1xf32> to vector<1x16x1xf32>
    %424 = vector.shape_cast %423 : vector<1x16x1xf32> to vector<16x1xf32>
    %425 = vector.broadcast %424 : vector<16x1xf32> to vector<16x64xf32>
    %426 = arith.mulf %422, %425 : vector<16x64xf32>
    %cst_73 = arith.constant dense<0.000000e+00> : vector<64xf32>
    %427 = vector.multi_reduction <add>, %426, %cst_73 [0] : vector<16x64xf32> to vector<64xf32>
    %428 = vector.shape_cast %427 : vector<64xf32> to vector<1x64xf32>
    %429 = vector.extract_strided_slice %146 {offsets = [15, 0], sizes = [1, 64], strides = [1, 1]} : vector<16x64xf32> to vector<1x64xf32>
    %430 = vector.broadcast %429 : vector<1x64xf32> to vector<16x64xf32>
    %431 = arith.mulf %430, %152 : vector<16x64xf32>
    %432 = math.exp %431 : vector<16x64xf32>
    %433 = arith.mulf %432, %422 : vector<16x64xf32>
    %434 = vector.extract_strided_slice %153 {offsets = [15, 0], sizes = [1, 64], strides = [1, 1]} : vector<16x64xf32> to vector<1x64xf32>
    %435 = vector.extract_strided_slice %154 {offsets = [15, 0, 0], sizes = [1, 16, 1], strides = [1, 1, 1]} : vector<16x16x1xf32> to vector<1x16x1xf32>
    %436 = vector.shape_cast %435 : vector<1x16x1xf32> to vector<16x1xf32>
    %437 = vector.broadcast %434 : vector<1x64xf32> to vector<16x64xf32>
    %438 = vector.broadcast %436 : vector<16x1xf32> to vector<16x64xf32>
    %439 = arith.mulf %437, %438 : vector<16x64xf32>
    %440 = arith.addf %433, %439 : vector<16x64xf32>
    %441 = vector.extract_strided_slice %155 {offsets = [15, 0, 0], sizes = [1, 16, 1], strides = [1, 1, 1]} : vector<16x16x1xf32> to vector<1x16x1xf32>
    %442 = vector.shape_cast %441 : vector<1x16x1xf32> to vector<16x1xf32>
    %443 = vector.broadcast %442 : vector<16x1xf32> to vector<16x64xf32>
    %444 = arith.mulf %440, %443 : vector<16x64xf32>
    %cst_74 = arith.constant dense<0.000000e+00> : vector<64xf32>
    %445 = vector.multi_reduction <add>, %444, %cst_74 [0] : vector<16x64xf32> to vector<64xf32>
    %446 = vector.shape_cast %445 : vector<64xf32> to vector<1x64xf32>
    %447 = tpu.concatenate %320, %338, %356, %374, %392, %410, %428, %446 in 0 : vector<1x64xf32>, vector<1x64xf32>, vector<1x64xf32>, vector<1x64xf32>, vector<1x64xf32>, vector<1x64xf32>, vector<1x64xf32>, vector<1x64xf32> -> vector<8x64xf32>
    %448 = tpu.concatenate %301, %447 in 0 : vector<8x64xf32>, vector<8x64xf32> -> vector<16x64xf32>
    %c0_75 = arith.constant 0 : index
    %c0_76 = arith.constant 0 : index
    %449 = vector.load %arg13[%c0_75, %c0_76] : memref<1x64xf32, #tpu.memory_space<vmem>>, vector<1x64xf32>
    %450 = vector.broadcast %449 : vector<1x64xf32> to vector<16x64xf32>
    %451 = arith.mulf %130, %450 : vector<16x64xf32>
    %452 = arith.addf %448, %451 : vector<16x64xf32>
    %cst_77 = arith.constant 5.000000e-01 : f32
    %453 = vector.broadcast %cst_77 : f32 to vector<16x64xf32>
    %454 = arith.mulf %453, %61 : vector<16x64xf32>
    %455 = math.tanh %454 : vector<16x64xf32>
    %cst_78 = arith.constant 1.000000e+00 : f32
    %456 = vector.broadcast %cst_78 : f32 to vector<16x64xf32>
    %457 = arith.addf %455, %456 : vector<16x64xf32>
    %cst_79 = arith.constant 5.000000e-01 : f32
    %458 = vector.broadcast %cst_79 : f32 to vector<16x64xf32>
    %459 = arith.mulf %458, %457 : vector<16x64xf32>
    %460 = arith.mulf %61, %459 : vector<16x64xf32>
    %461 = arith.mulf %452, %460 : vector<16x64xf32>
    %c0_80 = arith.constant 0 : index
    %c0_81 = arith.constant 0 : index
    %462 = vector.load %arg14[%c0_80, %c0_81] : memref<64x32xf32, #tpu.memory_space<vmem>>, vector<64x32xf32>
    %463 = arith.truncf %461 : vector<16x64xf32> to vector<16x64xbf16>
    %464 = arith.truncf %462 : vector<64x32xf32> to vector<64x32xbf16>
    %cst_82 = arith.constant dense<0.000000e+00> : vector<16x32xf32>
    %465 = tpu.matmul %463, %464, %cst_82 {dimension_numbers = #tpu.dot_dimension_numbers<[1], [0], [0], [1], [0, 0, 1, 1], [], []>} : vector<16x64xbf16>, vector<64x32xbf16>, vector<16x32xf32> -> vector<16x32xf32>
    %466 = arith.addf %55, %465 : vector<16x32xf32>
    %cst_83 = arith.constant dense<0.000000e+00> : vector<16xf32>
    %467 = vector.multi_reduction <add>, %466, %cst_83 [1] : vector<16x32xf32> to vector<16xf32>
    %468 = vector.shape_cast %467 : vector<16xf32> to vector<16x1xf32>
    %cst_84 = arith.constant 3.200000e+01 : f32
    %469 = vector.broadcast %cst_84 : f32 to vector<16x1xf32>
    %470 = arith.divf %468, %469 : vector<16x1xf32>
    %471 = vector.broadcast %470 : vector<16x1xf32> to vector<16x32xf32>
    %472 = arith.subf %466, %471 : vector<16x32xf32>
    %473 = vector.broadcast %470 : vector<16x1xf32> to vector<16x32xf32>
    %474 = arith.subf %466, %473 : vector<16x32xf32>
    %475 = arith.mulf %472, %474 : vector<16x32xf32>
    %cst_85 = arith.constant dense<0.000000e+00> : vector<16xf32>
    %476 = vector.multi_reduction <add>, %475, %cst_85 [1] : vector<16x32xf32> to vector<16xf32>
    %477 = vector.shape_cast %476 : vector<16xf32> to vector<16x1xf32>
    %cst_86 = arith.constant 3.200000e+01 : f32
    %478 = vector.broadcast %cst_86 : f32 to vector<16x1xf32>
    %479 = arith.divf %477, %478 : vector<16x1xf32>
    %480 = vector.broadcast %470 : vector<16x1xf32> to vector<16x32xf32>
    %481 = arith.subf %466, %480 : vector<16x32xf32>
    %cst_87 = arith.constant 9.99999974E-6 : f32
    %482 = vector.broadcast %cst_87 : f32 to vector<16x1xf32>
    %483 = arith.addf %479, %482 : vector<16x1xf32>
    %484 = math.rsqrt %483 : vector<16x1xf32>
    %485 = vector.broadcast %484 : vector<16x1xf32> to vector<16x32xf32>
    %486 = arith.mulf %481, %485 : vector<16x32xf32>
    %c0_88 = arith.constant 0 : index
    %c0_89 = arith.constant 0 : index
    %487 = vector.load %arg15[%c0_88, %c0_89] : memref<1x32xf32, #tpu.memory_space<vmem>>, vector<1x32xf32>
    %488 = vector.broadcast %487 : vector<1x32xf32> to vector<16x32xf32>
    %489 = arith.mulf %486, %488 : vector<16x32xf32>
    %c0_90 = arith.constant 0 : index
    %c0_91 = arith.constant 0 : index
    %490 = vector.load %arg16[%c0_90, %c0_91] : memref<1x32xf32, #tpu.memory_space<vmem>>, vector<1x32xf32>
    %491 = vector.broadcast %490 : vector<1x32xf32> to vector<16x32xf32>
    %492 = arith.addf %489, %491 : vector<16x32xf32>
    %c0_92 = arith.constant 0 : index
    %c0_93 = arith.constant 0 : index
    %493 = vector.load %arg17[%c0_92, %c0_93] : memref<16x32xf32, #tpu.memory_space<vmem>>, vector<16x32xf32>
    tpu.vector_store %arg17[%c0_92, %c0_93], %492 {strides = array<i32>} : memref<16x32xf32, #tpu.memory_space<vmem>>, vector<16x32xf32>,
    return
  }
  func.func @transform_0(%arg0: i32, %arg1: memref<2xi32, #tpu.memory_space<smem>>) -> (i32, i32) {
    %c0_i32 = arith.constant 0 : i32
    %c0_i32_0 = arith.constant 0 : i32
    %c0_i32_1 = arith.constant 0 : i32
    return %c0_i32, %c0_i32_0 : i32, i32
  }
  func.func @transform_1(%arg0: i32, %arg1: memref<2xi32, #tpu.memory_space<smem>>) -> (i32, i32) {
    %c0_i32 = arith.constant 0 : i32
    %c0_i32_0 = arith.constant 0 : i32
    %c0_i32_1 = arith.constant 0 : i32
    return %c0_i32, %c0_i32_0 : i32, i32
  }
  func.func @transform_2(%arg0: i32, %arg1: memref<2xi32, #tpu.memory_space<smem>>) -> (i32, i32) {
    %c0_i32 = arith.constant 0 : i32
    %c0_i32_0 = arith.constant 0 : i32
    %c0_i32_1 = arith.constant 0 : i32
    return %c0_i32, %c0_i32_0 : i32, i32
  }
  func.func @transform_3(%arg0: i32, %arg1: memref<2xi32, #tpu.memory_space<smem>>) -> (i32, i32) {
    %c0_i32 = arith.constant 0 : i32
    %c0_i32_0 = arith.constant 0 : i32
    %c0_i32_1 = arith.constant 0 : i32
    return %c0_i32, %c0_i32_0 : i32, i32
  }
  func.func @transform_4(%arg0: i32, %arg1: memref<2xi32, #tpu.memory_space<smem>>) -> (i32, i32) {
    %c0_i32 = arith.constant 0 : i32
    %c0_i32_0 = arith.constant 0 : i32
    %c0_i32_1 = arith.constant 0 : i32
    return %c0_i32, %c0_i32_0 : i32, i32
  }
  func.func @transform_5(%arg0: i32, %arg1: memref<2xi32, #tpu.memory_space<smem>>) -> (i32, i32) {
    %c0_i32 = arith.constant 0 : i32
    %c0_i32_0 = arith.constant 0 : i32
    %c0_i32_1 = arith.constant 0 : i32
    return %c0_i32, %c0_i32_0 : i32, i32
  }
  func.func @transform_6(%arg0: i32, %arg1: memref<2xi32, #tpu.memory_space<smem>>) -> (i32, i32) {
    %c0_i32 = arith.constant 0 : i32
    %c0_i32_0 = arith.constant 0 : i32
    %c0_i32_1 = arith.constant 0 : i32
    return %c0_i32, %c0_i32_0 : i32, i32
  }
  func.func @transform_7(%arg0: i32, %arg1: memref<2xi32, #tpu.memory_space<smem>>) -> (i32, i32) {
    %c0_i32 = arith.constant 0 : i32
    %c0_i32_0 = arith.constant 0 : i32
    %c0_i32_1 = arith.constant 0 : i32
    return %c0_i32, %c0_i32_0 : i32, i32
  }
  func.func @transform_8(%arg0: i32, %arg1: memref<2xi32, #tpu.memory_space<smem>>) -> (i32, i32) {
    %c0_i32 = arith.constant 0 : i32
    %c0_i32_0 = arith.constant 0 : i32
    %c0_i32_1 = arith.constant 0 : i32
    return %c0_i32, %c0_i32_0 : i32, i32
  }
  func.func @transform_9(%arg0: i32, %arg1: memref<2xi32, #tpu.memory_space<smem>>) -> (i32, i32) {
    %c0_i32 = arith.constant 0 : i32
    %c0_i32_0 = arith.constant 0 : i32
    %c0_i32_1 = arith.constant 0 : i32
    return %c0_i32, %c0_i32_0 : i32, i32
  }
  func.func @transform_10(%arg0: i32, %arg1: memref<2xi32, #tpu.memory_space<smem>>) -> (i32, i32) {
    %c0_i32 = arith.constant 0 : i32
    %c0_i32_0 = arith.constant 0 : i32
    %c0_i32_1 = arith.constant 0 : i32
    return %c0_i32, %c0_i32_0 : i32, i32
  }
  func.func @transform_11(%arg0: i32, %arg1: memref<2xi32, #tpu.memory_space<smem>>) -> (i32, i32) {
    %c0_i32 = arith.constant 0 : i32
    %c0_i32_0 = arith.constant 0 : i32
    %c0_i32_1 = arith.constant 0 : i32
    return %c0_i32, %c0_i32_0 : i32, i32
  }
  func.func @transform_12(%arg0: i32, %arg1: memref<2xi32, #tpu.memory_space<smem>>) -> (i32, i32) {
    %c0_i32 = arith.constant 0 : i32
    %c0_i32_0 = arith.constant 0 : i32
    %c0_i32_1 = arith.constant 0 : i32
    return %c0_i32, %c0_i32_0 : i32, i32
  }
  func.func @transform_13(%arg0: i32, %arg1: memref<2xi32, #tpu.memory_space<smem>>) -> (i32, i32) {
    %c0_i32 = arith.constant 0 : i32
    %c0_i32_0 = arith.constant 0 : i32
    %c0_i32_1 = arith.constant 0 : i32
    return %c0_i32, %c0_i32_0 : i32, i32
  }
  func.func @transform_14(%arg0: i32, %arg1: memref<2xi32, #tpu.memory_space<smem>>) -> (i32, i32) {
    %c0_i32 = arith.constant 0 : i32
    %c0_i32_0 = arith.constant 0 : i32
    %c0_i32_1 = arith.constant 0 : i32
    return %c0_i32, %c0_i32_0 : i32, i32
  }
  func.func @transform_15(%arg0: i32, %arg1: memref<2xi32, #tpu.memory_space<smem>>) -> (i32, i32) {
    %c0_i32 = arith.constant 0 : i32
    %c0_i32_0 = arith.constant 0 : i32
    %c0_i32_1 = arith.constant 0 : i32
    return %c0_i32, %c0_i32_0 : i32, i32
  }
}

</mosaic_0001>

<llo_original>
// kernel: tpu_custom_call.1
$region0: #{tpu_custom_call.1}
  #allocation0 [shape = 'u32[]', space=smem, size = 0x4, offset = 0x4, fixed_abs, tag = 'smem constant byte address 0x4 - core index']
  #allocation1 [shape = 'u32[72,128]{1,0:T(1,128)}', space=vmem, size = 0x9000, scoped, tag = 'internal scratch']
  #allocation2 [shape = 's32[1]{0}', space=sflag, size = 0x4, scoped, tag = 'scoped memory for tpu_custom_call.1']
  #allocation3 [shape = 'u8[512]{0}', space=smem, size = 0x200, scoped, tag = 'prefetched SMEM operand 0']
  %s0 = inlined_call_operand.hbm [shape: s32[2], index: 0, kind: input, shape index: {}]
  %s1 = inlined_call_operand.vmem [shape: f32[16,7], index: 1, kind: input, shape index: {}]
  %s2 = inlined_call_operand.vmem [shape: f32[16,4], index: 2, kind: input, shape index: {}]
  %s3 = inlined_call_operand.hbm [shape: f32[7,96], index: 3, kind: input, shape index: {}]
  %s4 = inlined_call_operand.vmem [shape: f32[4,32], index: 4, kind: input, shape index: {}]
  %s5 = inlined_call_operand.hbm [shape: f32[8,32], index: 5, kind: input, shape index: {}]
  %s6 = inlined_call_operand.vmem [shape: f32[32,128], index: 6, kind: input, shape index: {}]
  %s7 = inlined_call_operand.hbm [shape: f32[4,64], index: 7, kind: input, shape index: {}]
  %s8 = inlined_call_operand.hbm [shape: f32[1,64], index: 8, kind: input, shape index: {}]
  %s9 = inlined_call_operand.vmem [shape: f32[64,96], index: 9, kind: input, shape index: {}]
  %s10 = inlined_call_operand.hbm [shape: f32[1,64], index: 10, kind: input, shape index: {}]
  %s11 = inlined_call_operand.vmem [shape: f32[16,64], index: 11, kind: input, shape index: {}]
  %s12 = inlined_call_operand.hbm [shape: f32[1,64], index: 12, kind: input, shape index: {}]
  %s13 = inlined_call_operand.vmem [shape: f32[64,32], index: 13, kind: input, shape index: {}]
  %s14 = inlined_call_operand.vmem [shape: f32[1,32], index: 14, kind: input, shape index: {}]
  %s15 = inlined_call_operand.hbm [shape: f32[1,32], index: 15, kind: input, shape index: {}]
  %s16 = inlined_call_operand.hbm [shape: f32[16,32], index: 16, kind: output, shape index: {}]
  %s17 = sld [smem:[#allocation0]]
  $region98: #{tpu_custom_call.1} parent=0
    _
  %s19 = ssub.s32 1, %s17
  %s20 = scalar_select 0, %s19, %s17
  %s22 = sshll.u32 %s0, 4
  %s23 = int_to_ptr.hbm [resolvable:$true] %s22
  %25 = dma.hbm_to_smem %s23, 16, [#allocation3], [#allocation2]
  %27 = dma.done [#allocation2], 16
  %28 = sfence
  $region1: #{tpu_custom_call.1} parent=0
    #allocation4 [shape = 'u8[4096]{0}', space=vmem, size = 0x1000, scoped, tag = 'input window, operand 3, single buffered']
    #allocation5 [shape = 's32[1]{0}', space=sflag, size = 0x4, scoped, tag = 'scoped memory for tpu_custom_call.1']
    #allocation6 [shape = 's32[1]{0}', space=sflag, size = 0x4, scoped, tag = 'scoped memory for tpu_custom_call.1']
    #allocation7 [shape = 'u8[4096]{0}', space=vmem, size = 0x1000, scoped, tag = 'input window, operand 5, single buffered']
    #allocation8 [shape = 's32[1]{0}', space=sflag, size = 0x4, scoped, tag = 'scoped memory for tpu_custom_call.1']
    #allocation9 [shape = 'u8[2048]{0}', space=vmem, size = 0x800, scoped, tag = 'input window, operand 7, single buffered']
    #allocation10 [shape = 'u8[512]{0}', space=vmem, size = 0x400, scoped, tag = 'input window, operand 8, single buffered']
    #allocation11 [shape = 's32[1]{0}', space=sflag, size = 0x4, scoped, tag = 'scoped memory for tpu_custom_call.1']
    #allocation12 [shape = 'u8[512]{0}', space=vmem, size = 0x400, scoped, tag = 'input window, operand 10, single buffered']
    #allocation13 [shape = 'u8[512]{0}', space=vmem, size = 0x400, scoped, tag = 'input window, operand 12, single buffered']
    #allocation14 [shape = 's32[1]{0}', space=sflag, size = 0x4, scoped, tag = 'scoped memory for tpu_custom_call.1']
    #allocation15 [shape = 'u8[512]{0}', space=vmem, size = 0x400, scoped, tag = 'input window, operand 15, single buffered']
    #allocation16 [shape = 'u8[8192]{0}', space=vmem, size = 0x2000, scoped, tag = 'output window, operand 0, single buffered']
    %29 = vsyncpa [#allocation5], 0
    %30 = vsyncpa [#allocation8], 0
    %31 = vsyncpa [#allocation11], 0
    %32 = vsyncpa [#allocation14], 0
    %33 = vsyncpa [#allocation6], 0
    // Predicated region
    $region2: #{tpu_custom_call.1} parent=1 // pred_check
      _
    $region3: #{tpu_custom_call.1} parent=1 // pred_check_branch
      %35 = sbr.rel (0) target = $region5
    $region4: #{tpu_custom_call.1} parent=1 // pred_region
      _
    $region5: #{tpu_custom_call.1} parent=1 // pred_fallthru
      _
    // Predicated region
    $region6: #{tpu_custom_call.1} parent=1 // pred_check
      _
    $region7: #{tpu_custom_call.1} parent=1 // pred_check_branch
      %37 = sbr.rel (0) target = $region9
    $region8: #{tpu_custom_call.1} parent=1 // pred_region
      _
    $region9: #{tpu_custom_call.1} parent=1 // pred_fallthru
      _
    // Predicated region
    $region10: #{tpu_custom_call.1} parent=1 // pred_check
      _
    $region11: #{tpu_custom_call.1} parent=1 // pred_check_branch
      %39 = sbr.rel (0) target = $region13
    $region12: #{tpu_custom_call.1} parent=1 // pred_region
      %41 = vsyncadd [#allocation5], 0
      %s43 = sshll.u32 %s3, 4
      %s44 = int_to_ptr.hbm [resolvable:$true] %s43
      %s45 = sshll.u32 [#allocation4], 4
      %s46 = int_to_ptr.vmem [resolvable:$true] %s45
      %48 = dma.hbm_to_vmem [thread:$0]  %s44, 128, %s46, [#allocation5]
    $region13: #{tpu_custom_call.1} parent=1 // pred_fallthru
      _
    // Predicated region
    $region14: #{tpu_custom_call.1} parent=1 // pred_check
      _
    $region15: #{tpu_custom_call.1} parent=1 // pred_check_branch
      %50 = sbr.rel (0) target = $region17
    $region16: #{tpu_custom_call.1} parent=1 // pred_region
      _
    $region17: #{tpu_custom_call.1} parent=1 // pred_fallthru
      _
    // Predicated region
    $region18: #{tpu_custom_call.1} parent=1 // pred_check
      _
    $region19: #{tpu_custom_call.1} parent=1 // pred_check_branch
      %52 = sbr.rel (0) target = $region21
    $region20: #{tpu_custom_call.1} parent=1 // pred_region
      %54 = vsyncadd [#allocation8], 0
      %s56 = sshll.u32 %s5, 4
      %s57 = int_to_ptr.hbm [resolvable:$true] %s56
      %s58 = sshll.u32 [#allocation7], 4
      %s59 = int_to_ptr.vmem [resolvable:$true] %s58
      %61 = dma.hbm_to_vmem [thread:$0]  %s57, 128, %s59, [#allocation8]
    $region21: #{tpu_custom_call.1} parent=1 // pred_fallthru
      _
    // Predicated region
    $region22: #{tpu_custom_call.1} parent=1 // pred_check
      _
    $region23: #{tpu_custom_call.1} parent=1 // pred_check_branch
      %63 = sbr.rel (0) target = $region25
    $region24: #{tpu_custom_call.1} parent=1 // pred_region
      _
    $region25: #{tpu_custom_call.1} parent=1 // pred_fallthru
      _
    // Predicated region
    $region26: #{tpu_custom_call.1} parent=1 // pred_check
      _
    $region27: #{tpu_custom_call.1} parent=1 // pred_check_branch
      %65 = sbr.rel (0) target = $region29
    $region28: #{tpu_custom_call.1} parent=1 // pred_region
      %67 = vsyncadd [#allocation8], 0
      %s69 = sshll.u32 %s7, 4
      %s70 = int_to_ptr.hbm [resolvable:$true] %s69
      %s71 = sshll.u32 [#allocation9], 4
      %s72 = int_to_ptr.vmem [resolvable:$true] %s71
      %74 = dma.hbm_to_vmem [thread:$0]  %s70, 64, %s72, [#allocation8]
    $region29: #{tpu_custom_call.1} parent=1 // pred_fallthru
      _
    // Predicated region
    $region30: #{tpu_custom_call.1} parent=1 // pred_check
      _
    $region31: #{tpu_custom_call.1} parent=1 // pred_check_branch
      %76 = sbr.rel (0) target = $region33
    $region32: #{tpu_custom_call.1} parent=1 // pred_region
      %78 = vsyncadd [#allocation11], 0
      %s80 = sshll.u32 %s8, 4
      %s81 = int_to_ptr.hbm [resolvable:$true] %s80
      %s82 = sshll.u32 [#allocation10], 4
      %s83 = int_to_ptr.vmem [resolvable:$true] %s82
      %85 = dma.hbm_to_vmem [thread:$0]  %s81, 16, %s83, [#allocation11]
    $region33: #{tpu_custom_call.1} parent=1 // pred_fallthru
      _
    // Predicated region
    $region34: #{tpu_custom_call.1} parent=1 // pred_check
      _
    $region35: #{tpu_custom_call.1} parent=1 // pred_check_branch
      %87 = sbr.rel (0) target = $region37
    $region36: #{tpu_custom_call.1} parent=1 // pred_region
      _
    $region37: #{tpu_custom_call.1} parent=1 // pred_fallthru
      _
    // Predicated region
    $region38: #{tpu_custom_call.1} parent=1 // pred_check
      _
    $region39: #{tpu_custom_call.1} parent=1 // pred_check_branch
      %89 = sbr.rel (0) target = $region41
    $region40: #{tpu_custom_call.1} parent=1 // pred_region
      %91 = vsyncadd [#allocation11], 0
      %s93 = sshll.u32 %s10, 4
      %s94 = int_to_ptr.hbm [resolvable:$true] %s93
      %s95 = sshll.u32 [#allocation12], 4
      %s96 = int_to_ptr.vmem [resolvable:$true] %s95
      %98 = dma.hbm_to_vmem [thread:$0]  %s94, 16, %s96, [#allocation11]
    $region41: #{tpu_custom_call.1} parent=1 // pred_fallthru
      _
    // Predicated region
    $region42: #{tpu_custom_call.1} parent=1 // pred_check
      _
    $region43: #{tpu_custom_call.1} parent=1 // pred_check_branch
      %100 = sbr.rel (0) target = $region45
    $region44: #{tpu_custom_call.1} parent=1 // pred_region
      _
    $region45: #{tpu_custom_call.1} parent=1 // pred_fallthru
      _
    // Predicated region
    $region46: #{tpu_custom_call.1} parent=1 // pred_check
      _
    $region47: #{tpu_custom_call.1} parent=1 // pred_check_branch
      %102 = sbr.rel (0) target = $region49
    $region48: #{tpu_custom_call.1} parent=1 // pred_region
      %104 = vsyncadd [#allocation14], 0
      %s106 = sshll.u32 %s12, 4
      %s107 = int_to_ptr.hbm [resolvable:$true] %s106
      %s108 = sshll.u32 [#allocation13], 4
      %s109 = int_to_ptr.vmem [resolvable:$true] %s108
      %111 = dma.hbm_to_vmem [thread:$0]  %s107, 16, %s109, [#allocation14]
    $region49: #{tpu_custom_call.1} parent=1 // pred_fallthru
      _
    // Predicated region
    $region50: #{tpu_custom_call.1} parent=1 // pred_check
      _
    $region51: #{tpu_custom_call.1} parent=1 // pred_check_branch
      %113 = sbr.rel (0) target = $region53
    $region52: #{tpu_custom_call.1} parent=1 // pred_region
      _
    $region53: #{tpu_custom_call.1} parent=1 // pred_fallthru
      _
    // Predicated region
    $region54: #{tpu_custom_call.1} parent=1 // pred_check
      _
    $region55: #{tpu_custom_call.1} parent=1 // pred_check_branch
      %115 = sbr.rel (0) target = $region57
    $region56: #{tpu_custom_call.1} parent=1 // pred_region
      _
    $region57: #{tpu_custom_call.1} parent=1 // pred_fallthru
      _
    // Predicated region
    $region58: #{tpu_custom_call.1} parent=1 // pred_check
      _
    $region59: #{tpu_custom_call.1} parent=1 // pred_check_branch
      %117 = sbr.rel (0) target = $region61
    $region60: #{tpu_custom_call.1} parent=1 // pred_region
      %119 = vsyncadd [#allocation14], 0
      %s121 = sshll.u32 %s15, 4
      %s122 = int_to_ptr.hbm [resolvable:$true] %s121
      %s123 = sshll.u32 [#allocation15], 4
      %s124 = int_to_ptr.vmem [resolvable:$true] %s123
      %126 = dma.hbm_to_vmem [thread:$0]  %s122, 16, %s124, [#allocation14]
    $region61: #{tpu_custom_call.1} parent=1 // pred_fallthru
      _
    // Predicated region
    $region62: #{tpu_custom_call.1} parent=1 // pred_check
      _
    $region63: #{tpu_custom_call.1} parent=1 // pred_check_branch
      %128 = sbr.rel (0) target = $region65
    $region64: #{tpu_custom_call.1} parent=1 // pred_region
      %130 = dma.done [#allocation5], 128
    $region65: #{tpu_custom_call.1} parent=1 // pred_fallthru
      _
    // Predicated region
    $region66: #{tpu_custom_call.1} parent=1 // pred_check
      _
    $region67: #{tpu_custom_call.1} parent=1 // pred_check_branch
      %132 = sbr.rel (0) target = $region69
    $region68: #{tpu_custom_call.1} parent=1 // pred_region
      %134 = dma.done [#allocation8], 128
    $region69: #{tpu_custom_call.1} parent=1 // pred_fallthru
      _
    // Predicated region
    $region70: #{tpu_custom_call.1} parent=1 // pred_check
      _
    $region71: #{tpu_custom_call.1} parent=1 // pred_check_branch
      %136 = sbr.rel (0) target = $region73
    $region72: #{tpu_custom_call.1} parent=1 // pred_region
      %138 = dma.done [#allocation8], 64
    $region73: #{tpu_custom_call.1} parent=1 // pred_fallthru
      _
    // Predicated region
    $region74: #{tpu_custom_call.1} parent=1 // pred_check
      _
    $region75: #{tpu_custom_call.1} parent=1 // pred_check_branch
      %140 = sbr.rel (0) target = $region77
    $region76: #{tpu_custom_call.1} parent=1 // pred_region
      %142 = dma.done [#allocation11], 16
    $region77: #{tpu_custom_call.1} parent=1 // pred_fallthru
      _
    // Predicated region
    $region78: #{tpu_custom_call.1} parent=1 // pred_check
      _
    $region79: #{tpu_custom_call.1} parent=1 // pred_check_branch
      %144 = sbr.rel (0) target = $region81
    $region80: #{tpu_custom_call.1} parent=1 // pred_region
      %146 = dma.done [#allocation11], 16
    $region81: #{tpu_custom_call.1} parent=1 // pred_fallthru
      _
    // Predicated region
    $region82: #{tpu_custom_call.1} parent=1 // pred_check
      _
    $region83: #{tpu_custom_call.1} parent=1 // pred_check_branch
      %148 = sbr.rel (0) target = $region85
    $region84: #{tpu_custom_call.1} parent=1 // pred_region
      %150 = dma.done [#allocation14], 16
    $region85: #{tpu_custom_call.1} parent=1 // pred_fallthru
      _
    // Predicated region
    $region86: #{tpu_custom_call.1} parent=1 // pred_check
      _
    $region87: #{tpu_custom_call.1} parent=1 // pred_check_branch
      %152 = sbr.rel (0) target = $region89
    $region88: #{tpu_custom_call.1} parent=1 // pred_region
      %154 = dma.done [#allocation14], 16
    $region89: #{tpu_custom_call.1} parent=1 // pred_fallthru
      _
    %v156 = vld [vmem:[%s1] sm:$0xff]
    %v157 = vld [vmem:[%s1 + $0x8] sm:$0xff]
    %v158 = vld [vmem:[#allocation4] sm:$0x7f]
    %v159 = vpack.c.bf16 %v157, %v156
    %v160 = vpack.c.bf16 %v158, %v158
    %vm161 = vcmask 56320
    %v163 = vsel %vm161, %v159, 0
    %vm165 = vcmask 1042432
    %vm166 = vcmask 1043456
    %v167 = vsel %vm165, 4294967295, 65535
    %v168 = vsel %vm166, %v167, 0
    %v170 = vand.u32 %v160, %v168
    %172 = vmatpush.bf16.msra.mxu0 0
    %173 = vmatpush.bf16.msra.mxu0 0
    %174 = vmatpush.bf16.msra.mxu0 0
    %175 = vmatpush.bf16.msra.mxu0 0
    %176 = vmatpush.bf16.msra.mxu0 0
    %177 = vmatpush.bf16.msra.mxu0 0
    %178 = vmatpush.bf16.msra.mxu0 0
    %179 = vmatpush.bf16.msra.mxu0 %v170
    %180 = vmatmul.bf16.gmra.mxu0 %v163
    %v181 = vpop.f32.mrf.mxu0
    %v182 = vadd.f32 0.0, %v181
    %v183 = vpop.f32.mrf.mxu0
    %v184 = vadd.f32 0.0, %v183
    %185 = vdwg.mxu0
    %v187 = vrot.slane %v182, 7
    %vm189 = vcmask 1040384
    %v190 = vsel %vm189, %v187, %v187
    %v191 = vrot.slane %v182, 1
    %vm193 = vcmask 1046528
    %v194 = vsel %vm193, %v191, %v191
    %195 = vrot.lane.b32.xlu0 %v182, 96
    %v196 = vpop.permute.xlu0 %195
    %v198 = vadd.f32 %v190, %v196
    %200 = vrot.lane.b32.xlu0 %v194, 64
    %v201 = vpop.permute.xlu0 %200
    %v203 = vadd.f32 %v198, %v201
    %v205 = vrot.slane %v184, 7
    %v207 = vsel %vm189, %v205, %v205
    %v208 = vrot.slane %v184, 1
    %v210 = vsel %vm193, %v208, %v208
    %211 = vrot.lane.b32.xlu0 %v184, 96
    %v212 = vpop.permute.xlu0 %211
    %v214 = vadd.f32 %v207, %v212
    %216 = vrot.lane.b32.xlu0 %v210, 64
    %v217 = vpop.permute.xlu0 %216
    %v219 = vadd.f32 %v214, %v217
    %v220 = vld [vmem:[%s2] sm:$0xff]
    %v221 = vld [vmem:[%s2 + $0x8] sm:$0xff]
    %v222 = vld [vmem:[%s4] sm:$0xf]
    %v223 = vpack.c.bf16 %v221, %v220
    %v224 = vpack.c.bf16 %v222, %v222
    %vm225 = vcmask 31744
    %v227 = vsel %vm225, %v223, 0
    %vm229 = vcmask 1041408
    %v231 = vsel %vm229, %v224, 0
    %233 = vmatpush.bf16.msra.mxu0 0
    %234 = vmatpush.bf16.msra.mxu0 0
    %235 = vmatpush.bf16.msra.mxu0 0
    %236 = vmatpush.bf16.msra.mxu0 0
    %237 = vmatpush.bf16.msra.mxu0 0
    %238 = vmatpush.bf16.msra.mxu0 0
    %239 = vmatpush.bf16.msra.mxu0 0
    %240 = vmatpush.bf16.msra.mxu0 %v231
    %241 = vmatmul.bf16.gmra.mxu0 %v227
    %v242 = vpop.f32.mrf.mxu0
    %v243 = vadd.f32 0.0, %v242
    %v244 = vpop.f32.mrf.mxu0
    %v245 = vadd.f32 0.0, %v244
    %246 = vdwg.mxu0
    %v247 = vlaneseq
    %v248 = vshrl.u32 %v247, 7
    %s249 = sld [smem:[#allocation3]]
    %v250 = vstv %s249
    %vm251 = vcmp.lt.s32.totalorder %v248, %v250
    %v252 = vld [vmem:[#allocation7] sm:$0xff]
    %v253 = vsel %vm251, 1, 0
    %vm254 = vcmp.eq.s32.totalorder %v253, 1
    %v255 = vsel %vm254, %v252, 0.0
    %s256 = sld [smem:[#allocation3 + $0x1]]
    %v257 = vstv %s256
    %vm258 = vcmp.lt.s32.totalorder %v248, %v257
    %v259 = vsel %vm258, 1, 0
    %vm260 = vcmp.eq.s32.totalorder %v259, 1
    %v261 = vsel %vm260, %v252, 0.0
    %v262 = vadd.f32 %v203, %v243
    %v263 = vadd.f32 %v219, %v245
    %v264 = vadd.f32 %v262, %v255
    %v265 = vadd.f32 %v263, %v261
    %v266 = vld [vmem:[%s6] sm:$0xff]
    %v267 = vld [vmem:[%s6 + $0x8] sm:$0xff]
    %v268 = vld [vmem:[%s6 + $0x10] sm:$0xff]
    %v269 = vld [vmem:[%s6 + $0x18] sm:$0xff]
    %v270 = vpack.c.bf16 %v265, %v264
    %v271 = vpack.c.bf16 %v267, %v266
    %v272 = vpack.c.bf16 %v269, %v268
    %vm273 = vcmask 261120
    %v275 = vsel %vm273, %v270, 0
    %277 = vmatpush.bf16.msra.mxu0 0
    %278 = vmatpush.bf16.msra.mxu0 0
    %279 = vmatpush.bf16.msra.mxu0 0
    %280 = vmatpush.bf16.msra.mxu0 0
    %281 = vmatpush.bf16.msra.mxu0 0
    %282 = vmatpush.bf16.msra.mxu0 0
    %283 = vmatpush.bf16.msra.mxu0 %v272
    %284 = vmatpush.bf16.msra.mxu0 %v271
    %285 = vmatmul.bf16.gmra.mxu0 %v275
    %v286 = vpop.f32.mrf.mxu0
    %v287 = vadd.f32 0.0, %v286
    %v288 = vpop.f32.mrf.mxu0
    %v289 = vadd.f32 0.0, %v288
    %290 = vdwg.mxu0
    %v291 = vld [vmem:[#allocation10] sm:$0x1]
    %v293 = vperm.slane %v291, 0
    %v295 = vadd.f32 %v293, 0.0
    %v297 = vrot.slane %v287, 5
    %v299 = vsel %vm165, 0.0, %v297
    %v300 = vld [vmem:[#allocation9] sm:$0x1]
    %v301 = vperm.slane %v300, 0
    %v302 = vmul.f32 %v299, %v301
    %v303 = vadd.f32 %v295, %v302
    %v304 = vrot.slane %v287, 6
    %v306 = vsel %vm229, 0.0, %v304
    %v307 = vld [vmem:[#allocation9 + $0x1] sm:$0x1]
    %v308 = vperm.slane %v307, 0
    %v309 = vmul.f32 %v306, %v308
    %v310 = vadd.f32 %v303, %v309
    %v311 = vrot.slane %v287, 7
    %v313 = vsel %vm189, 0.0, %v311
    %v314 = vld [vmem:[#allocation9 + $0x2] sm:$0x1]
    %v315 = vperm.slane %v314, 0
    %v316 = vmul.f32 %v313, %v315
    %v317 = vadd.f32 %v310, %v316
    %v318 = vld [vmem:[#allocation9 + $0x3] sm:$0x1]
    %v319 = vperm.slane %v318, 0
    %v320 = vmul.f32 %v287, %v319
    %v321 = vadd.f32 %v317, %v320
    %v323 = vrot.slane %v289, 5
    %v325 = vsel %vm165, 0.0, %v323
    %v326 = vmul.f32 %v325, %v301
    %v327 = vadd.f32 %v295, %v326
    %v328 = vrot.slane %v289, 6
    %v330 = vsel %vm229, 0.0, %v328
    %v331 = vmul.f32 %v330, %v308
    %v332 = vadd.f32 %v327, %v331
    %v333 = vrot.slane %v289, 7
    %v335 = vsel %vm189, 0.0, %v333
    %v336 = vmul.f32 %v335, %v315
    %v337 = vadd.f32 %v332, %v336
    %v338 = vmul.f32 %v289, %v319
    %v339 = vadd.f32 %v337, %v338
    %v340 = vmul.f32 %v321, 0.5
    %v341 = vmul.f32 %v339, 0.5
    %v342 = vtanh.pop %v340
    %v343 = vtanh.pop %v341
    %v344 = vadd.f32 %v342, 1.0
    %v345 = vadd.f32 %v343, 1.0
    %v346 = vmul.f32 %v344, 0.5
    %v347 = vmul.f32 %v345, 0.5
    %v348 = vmul.f32 %v321, %v346
    %v349 = vmul.f32 %v339, %v347
    %v350 = vld [vmem:[%s9] sm:$0xff]
    %v351 = vld [vmem:[%s9 + $0x8] sm:$0xff]
    %v352 = vld [vmem:[%s9 + $0x10] sm:$0xff]
    %v353 = vld [vmem:[%s9 + $0x18] sm:$0xff]
    %v354 = vld [vmem:[%s9 + $0x20] sm:$0xff]
    %v355 = vld [vmem:[%s9 + $0x28] sm:$0xff]
    %v356 = vld [vmem:[%s9 + $0x30] sm:$0xff]
    %v357 = vld [vmem:[%s9 + $0x38] sm:$0xff]
    %v358 = vpack.c.bf16 %v349, %v348
    %v359 = vpack.c.bf16 %v351, %v350
    %v360 = vpack.c.bf16 %v353, %v352
    %v361 = vpack.c.bf16 %v355, %v354
    %v362 = vpack.c.bf16 %v357, %v356
    %vm363 = vcmask 523264
    %v365 = vsel %vm363, %v358, 0
    %367 = vmatpush.bf16.msra.mxu0 0
    %368 = vmatpush.bf16.msra.mxu0 0
    %369 = vmatpush.bf16.msra.mxu0 0
    %370 = vmatpush.bf16.msra.mxu0 0
    %371 = vmatpush.bf16.msra.mxu0 %v362
    %372 = vmatpush.bf16.msra.mxu0 %v361
    %373 = vmatpush.bf16.msra.mxu0 %v360
    %374 = vmatpush.bf16.msra.mxu0 %v359
    %375 = vmatmul.bf16.gmra.mxu0 %v365
    %v376 = vpop.f32.mrf.mxu0
    %v377 = vadd.f32 0.0, %v376
    %v378 = vpop.f32.mrf.mxu0
    %v379 = vadd.f32 0.0, %v378
    %380 = vdwg.mxu0
    %v381 = vld [vmem:[#allocation12] sm:$0x1]
    %v383 = vperm.slane %v381, 0
    %v385 = vadd.f32 %v377, %v383
    %v386 = vadd.f32 %v379, %v383
    %v387 = vmax.f32 %v385, 0.0
    %v388 = vmax.f32 %v386, 0.0
    %v389 = vand.u32 2147483647, %v385
    %v390 = vand.u32 2147483647, %v386
    %v391 = vsub.f32 0.0, %v389
    %v392 = vsub.f32 0.0, %v390
    %v393 = vmul.f32 %v391, 1.442695
    %v394 = vpow.pop %v393
    %v395 = vmul.f32 %v392, 1.442695
    %v396 = vpow.pop %v395
    %v397 = vadd.f32 %v394, 1.0
    %v398 = vlog2.pop %v397
    %v399 = vmul.f32 %v398, 0.6931472
    %v400 = vmul.f32 -0.5, %v394
    %v401 = vadd.f32 %v400, 1.0
    %v402 = vmul.f32 %v401, %v394
    %v403 = vand.u32 2147483647, %v394
    %vm404 = vcmp.lt.f32.partialorder %v403, 0.0004427343
    %v405 = vsel %vm404, %v402, %v399
    %v406 = vadd.f32 %v396, 1.0
    %v407 = vlog2.pop %v406
    %v408 = vmul.f32 %v407, 0.6931472
    %v409 = vmul.f32 -0.5, %v396
    %v410 = vadd.f32 %v409, 1.0
    %v411 = vmul.f32 %v410, %v396
    %v412 = vand.u32 2147483647, %v396
    %vm413 = vcmp.lt.f32.partialorder %v412, 0.0004427343
    %v414 = vsel %vm413, %v411, %v408
    %v415 = vadd.f32 %v387, %v405
    %v416 = vadd.f32 %v388, %v414
    %v417 = vld [vmem:[%s11] sm:$0xff]
    %v418 = vld [vmem:[%s11 + $0x8] sm:$0xff]
    %v419 = vmul.f32 %v417, 1.442695
    %v420 = vpow.pop %v419
    %v421 = vmul.f32 %v418, 1.442695
    %v422 = vpow.pop %v421
    %v423 = vsub.f32 0.0, %v420
    %v424 = vsub.f32 0.0, %v422
    %v425 = vmul.f32 %v415, %v348
    %v426 = vmul.f32 %v416, %v349
    %v427 = vperm.slane %v377, 0
    %v428 = vlaneseq
    %v429 = vshrl.u32 %v428, 7
    %v430 = vadd.s32 %v429, 64
    %431 = vset.pattern.permute.xlu0 %v430
    %432 = vperm.xlu0 %431, %v427
    %v433 = vpop.permute.xlu0 %432
    %v434 = vlaneseq
    %v435 = vshrl.u32 %v434, 7
    %v436 = vadd.s32 %v435, 72
    %437 = vset.pattern.permute.xlu0 %v436
    %438 = vperm.xlu0 %437, %v427
    %v439 = vpop.permute.xlu0 %438
    %v440 = vperm.slane %v377, 1
    %v441 = vlaneseq
    %v442 = vshrl.u32 %v441, 7
    %v443 = vadd.s32 %v442, 64
    %444 = vset.pattern.permute.xlu0 %v443
    %445 = vperm.xlu0 %444, %v440
    %v446 = vpop.permute.xlu0 %445
    %v447 = vlaneseq
    %v448 = vshrl.u32 %v447, 7
    %v449 = vadd.s32 %v448, 72
    %450 = vset.pattern.permute.xlu0 %v449
    %451 = vperm.xlu0 %450, %v440
    %v452 = vpop.permute.xlu0 %451
    %v453 = vperm.slane %v377, 2
    %v454 = vlaneseq
    %v455 = vshrl.u32 %v454, 7
    %v456 = vadd.s32 %v455, 64
    %457 = vset.pattern.permute.xlu0 %v456
    %458 = vperm.xlu0 %457, %v453
    %v459 = vpop.permute.xlu0 %458
    %v460 = vlaneseq
    %v461 = vshrl.u32 %v460, 7
    %v462 = vadd.s32 %v461, 72
    %463 = vset.pattern.permute.xlu0 %v462
    %464 = vperm.xlu0 %463, %v453
    %v465 = vpop.permute.xlu0 %464
    %v466 = vperm.slane %v377, 3
    %v467 = vlaneseq
    %v468 = vshrl.u32 %v467, 7
    %v469 = vadd.s32 %v468, 64
    %470 = vset.pattern.permute.xlu0 %v469
    %471 = vperm.xlu0 %470, %v466
    %v472 = vpop.permute.xlu0 %471
    %v473 = vlaneseq
    %v474 = vshrl.u32 %v473, 7
    %v475 = vadd.s32 %v474, 72
    %476 = vset.pattern.permute.xlu0 %v475
    %477 = vperm.xlu0 %476, %v466
    %v478 = vpop.permute.xlu0 %477
    %v479 = vperm.slane %v377, 4
    %v480 = vlaneseq
    %v481 = vshrl.u32 %v480, 7
    %v482 = vadd.s32 %v481, 64
    %483 = vset.pattern.permute.xlu0 %v482
    %484 = vperm.xlu0 %483, %v479
    %v485 = vpop.permute.xlu0 %484
    %v486 = vlaneseq
    %v487 = vshrl.u32 %v486, 7
    %v488 = vadd.s32 %v487, 72
    %489 = vset.pattern.permute.xlu0 %v488
    %490 = vperm.xlu0 %489, %v479
    %v491 = vpop.permute.xlu0 %490
    %v492 = vperm.slane %v377, 5
    %v493 = vlaneseq
    %v494 = vshrl.u32 %v493, 7
    %v495 = vadd.s32 %v494, 64
    %496 = vset.pattern.permute.xlu0 %v495
    %497 = vperm.xlu0 %496, %v492
    %v498 = vpop.permute.xlu0 %497
    %v499 = vlaneseq
    %v500 = vshrl.u32 %v499, 7
    %v501 = vadd.s32 %v500, 72
    %502 = vset.pattern.permute.xlu0 %v501
    %503 = vperm.xlu0 %502, %v492
    %v504 = vpop.permute.xlu0 %503
    %v505 = vperm.slane %v377, 6
    %v506 = vlaneseq
    %v507 = vshrl.u32 %v506, 7
    %v508 = vadd.s32 %v507, 64
    %509 = vset.pattern.permute.xlu0 %v508
    %510 = vperm.xlu0 %509, %v505
    %v511 = vpop.permute.xlu0 %510
    %v512 = vlaneseq
    %v513 = vshrl.u32 %v512, 7
    %v514 = vadd.s32 %v513, 72
    %515 = vset.pattern.permute.xlu0 %v514
    %516 = vperm.xlu0 %515, %v505
    %v517 = vpop.permute.xlu0 %516
    %v518 = vperm.slane %v377, 7
    %v519 = vlaneseq
    %v520 = vshrl.u32 %v519, 7
    %v521 = vadd.s32 %v520, 64
    %522 = vset.pattern.permute.xlu0 %v521
    %523 = vperm.xlu0 %522, %v518
    %v524 = vpop.permute.xlu0 %523
    %v525 = vlaneseq
    %v526 = vshrl.u32 %v525, 7
    %v527 = vadd.s32 %v526, 72
    %528 = vset.pattern.permute.xlu0 %v527
    %529 = vperm.xlu0 %528, %v518
    %v530 = vpop.permute.xlu0 %529
    %v531 = vperm.slane %v379, 0
    %v532 = vlaneseq
    %v533 = vshrl.u32 %v532, 7
    %v534 = vadd.s32 %v533, 64
    %535 = vset.pattern.permute.xlu0 %v534
    %536 = vperm.xlu0 %535, %v531
    %v537 = vpop.permute.xlu0 %536
    %v538 = vlaneseq
    %v539 = vshrl.u32 %v538, 7
    %v540 = vadd.s32 %v539, 72
    %541 = vset.pattern.permute.xlu0 %v540
    %542 = vperm.xlu0 %541, %v531
    %v543 = vpop.permute.xlu0 %542
    %v544 = vperm.slane %v379, 1
    %v545 = vlaneseq
    %v546 = vshrl.u32 %v545, 7
    %v547 = vadd.s32 %v546, 64
    %548 = vset.pattern.permute.xlu0 %v547
    %549 = vperm.xlu0 %548, %v544
    %v550 = vpop.permute.xlu0 %549
    %v551 = vlaneseq
    %v552 = vshrl.u32 %v551, 7
    %v553 = vadd.s32 %v552, 72
    %554 = vset.pattern.permute.xlu0 %v553
    %555 = vperm.xlu0 %554, %v544
    %v556 = vpop.permute.xlu0 %555
    %v557 = vperm.slane %v379, 2
    %v558 = vlaneseq
    %v559 = vshrl.u32 %v558, 7
    %v560 = vadd.s32 %v559, 64
    %561 = vset.pattern.permute.xlu0 %v560
    %562 = vperm.xlu0 %561, %v557
    %v563 = vpop.permute.xlu0 %562
    %v564 = vlaneseq
    %v565 = vshrl.u32 %v564, 7
    %v566 = vadd.s32 %v565, 72
    %567 = vset.pattern.permute.xlu0 %v566
    %568 = vperm.xlu0 %567, %v557
    %v569 = vpop.permute.xlu0 %568
    %v570 = vperm.slane %v379, 3
    %v571 = vlaneseq
    %v572 = vshrl.u32 %v571, 7
    %v573 = vadd.s32 %v572, 64
    %574 = vset.pattern.permute.xlu0 %v573
    %575 = vperm.xlu0 %574, %v570
    %v576 = vpop.permute.xlu0 %575
    %v577 = vlaneseq
    %v578 = vshrl.u32 %v577, 7
    %v579 = vadd.s32 %v578, 72
    %580 = vset.pattern.permute.xlu0 %v579
    %581 = vperm.xlu0 %580, %v570
    %v582 = vpop.permute.xlu0 %581
    %v583 = vperm.slane %v379, 4
    %v584 = vlaneseq
    %v585 = vshrl.u32 %v584, 7
    %v586 = vadd.s32 %v585, 64
    %587 = vset.pattern.permute.xlu0 %v586
    %588 = vperm.xlu0 %587, %v583
    %v589 = vpop.permute.xlu0 %588
    %v590 = vlaneseq
    %v591 = vshrl.u32 %v590, 7
    %v592 = vadd.s32 %v591, 72
    %593 = vset.pattern.permute.xlu0 %v592
    %594 = vperm.xlu0 %593, %v583
    %v595 = vpop.permute.xlu0 %594
    %v596 = vperm.slane %v379, 5
    %v597 = vlaneseq
    %v598 = vshrl.u32 %v597, 7
    %v599 = vadd.s32 %v598, 64
    %600 = vset.pattern.permute.xlu0 %v599
    %601 = vperm.xlu0 %600, %v596
    %v602 = vpop.permute.xlu0 %601
    %v603 = vlaneseq
    %v604 = vshrl.u32 %v603, 7
    %v605 = vadd.s32 %v604, 72
    %606 = vset.pattern.permute.xlu0 %v605
    %607 = vperm.xlu0 %606, %v596
    %v608 = vpop.permute.xlu0 %607
    %v609 = vperm.slane %v379, 6
    %v610 = vlaneseq
    %v611 = vshrl.u32 %v610, 7
    %v612 = vadd.s32 %v611, 64
    %613 = vset.pattern.permute.xlu0 %v612
    %614 = vperm.xlu0 %613, %v609
    %v615 = vpop.permute.xlu0 %614
    %v616 = vlaneseq
    %v617 = vshrl.u32 %v616, 7
    %v618 = vadd.s32 %v617, 72
    %619 = vset.pattern.permute.xlu0 %v618
    %620 = vperm.xlu0 %619, %v609
    %v621 = vpop.permute.xlu0 %620
    %v622 = vperm.slane %v379, 7
    %v623 = vlaneseq
    %v624 = vshrl.u32 %v623, 7
    %v625 = vadd.s32 %v624, 64
    %626 = vset.pattern.permute.xlu0 %v625
    %627 = vperm.xlu0 %626, %v622
    %v628 = vpop.permute.xlu0 %627
    %v629 = vlaneseq
    %v630 = vshrl.u32 %v629, 7
    %v631 = vadd.s32 %v630, 72
    %632 = vset.pattern.permute.xlu0 %v631
    %633 = vperm.xlu0 %632, %v622
    %v634 = vpop.permute.xlu0 %633
    %v635 = vlaneseq
    %v636 = vshrl.u32 %v635, 7
    %v637 = vadd.s32 %v636, 80
    %638 = vset.pattern.permute.xlu0 %v637
    %639 = vperm.xlu0 %638, %v427
    %v640 = vpop.permute.xlu0 %639
    %v641 = vlaneseq
    %v642 = vshrl.u32 %v641, 7
    %v643 = vadd.s32 %v642, 88
    %644 = vset.pattern.permute.xlu0 %v643
    %645 = vperm.xlu0 %644, %v427
    %v646 = vpop.permute.xlu0 %645
    %v647 = vlaneseq
    %v648 = vshrl.u32 %v647, 7
    %v649 = vadd.s32 %v648, 80
    %650 = vset.pattern.permute.xlu0 %v649
    %651 = vperm.xlu0 %650, %v440
    %v652 = vpop.permute.xlu0 %651
    %v653 = vlaneseq
    %v654 = vshrl.u32 %v653, 7
    %v655 = vadd.s32 %v654, 88
    %656 = vset.pattern.permute.xlu0 %v655
    %657 = vperm.xlu0 %656, %v440
    %v658 = vpop.permute.xlu0 %657
    %v659 = vlaneseq
    %v660 = vshrl.u32 %v659, 7
    %v661 = vadd.s32 %v660, 80
    %662 = vset.pattern.permute.xlu0 %v661
    %663 = vperm.xlu0 %662, %v453
    %v664 = vpop.permute.xlu0 %663
    %v665 = vlaneseq
    %v666 = vshrl.u32 %v665, 7
    %v667 = vadd.s32 %v666, 88
    %668 = vset.pattern.permute.xlu0 %v667
    %669 = vperm.xlu0 %668, %v453
    %v670 = vpop.permute.xlu0 %669
    %v671 = vlaneseq
    %v672 = vshrl.u32 %v671, 7
    %v673 = vadd.s32 %v672, 80
    %674 = vset.pattern.permute.xlu0 %v673
    %675 = vperm.xlu0 %674, %v466
    %v676 = vpop.permute.xlu0 %675
    %v677 = vlaneseq
    %v678 = vshrl.u32 %v677, 7
    %v679 = vadd.s32 %v678, 88
    %680 = vset.pattern.permute.xlu0 %v679
    %681 = vperm.xlu0 %680, %v466
    %v682 = vpop.permute.xlu0 %681
    %v683 = vlaneseq
    %v684 = vshrl.u32 %v683, 7
    %v685 = vadd.s32 %v684, 80
    %686 = vset.pattern.permute.xlu0 %v685
    %687 = vperm.xlu0 %686, %v479
    %v688 = vpop.permute.xlu0 %687
    %v689 = vlaneseq
    %v690 = vshrl.u32 %v689, 7
    %v691 = vadd.s32 %v690, 88
    %692 = vset.pattern.permute.xlu0 %v691
    %693 = vperm.xlu0 %692, %v479
    %v694 = vpop.permute.xlu0 %693
    %v695 = vlaneseq
    %v696 = vshrl.u32 %v695, 7
    %v697 = vadd.s32 %v696, 80
    %698 = vset.pattern.permute.xlu0 %v697
    %699 = vperm.xlu0 %698, %v492
    %v700 = vpop.permute.xlu0 %699
    %v701 = vlaneseq
    %v702 = vshrl.u32 %v701, 7
    %v703 = vadd.s32 %v702, 88
    %704 = vset.pattern.permute.xlu0 %v703
    %705 = vperm.xlu0 %704, %v492
    %v706 = vpop.permute.xlu0 %705
    %v707 = vlaneseq
    %v708 = vshrl.u32 %v707, 7
    %v709 = vadd.s32 %v708, 80
    %710 = vset.pattern.permute.xlu0 %v709
    %711 = vperm.xlu0 %710, %v505
    %v712 = vpop.permute.xlu0 %711
    %v713 = vlaneseq
    %v714 = vshrl.u32 %v713, 7
    %v715 = vadd.s32 %v714, 88
    %716 = vset.pattern.permute.xlu0 %v715
    %717 = vperm.xlu0 %716, %v505
    %v718 = vpop.permute.xlu0 %717
    %v719 = vlaneseq
    %v720 = vshrl.u32 %v719, 7
    %v721 = vadd.s32 %v720, 80
    %722 = vset.pattern.permute.xlu0 %v721
    %723 = vperm.xlu0 %722, %v518
    %v724 = vpop.permute.xlu0 %723
    %v725 = vlaneseq
    %v726 = vshrl.u32 %v725, 7
    %v727 = vadd.s32 %v726, 88
    %728 = vset.pattern.permute.xlu0 %v727
    %729 = vperm.xlu0 %728, %v518
    %v730 = vpop.permute.xlu0 %729
    %v731 = vlaneseq
    %v732 = vshrl.u32 %v731, 7
    %v733 = vadd.s32 %v732, 80
    %734 = vset.pattern.permute.xlu0 %v733
    %735 = vperm.xlu0 %734, %v531
    %v736 = vpop.permute.xlu0 %735
    %v737 = vlaneseq
    %v738 = vshrl.u32 %v737, 7
    %v739 = vadd.s32 %v738, 88
    %740 = vset.pattern.permute.xlu0 %v739
    %741 = vperm.xlu0 %740, %v531
    %v742 = vpop.permute.xlu0 %741
    %v743 = vlaneseq
    %v744 = vshrl.u32 %v743, 7
    %v745 = vadd.s32 %v744, 80
    %746 = vset.pattern.permute.xlu0 %v745
    %747 = vperm.xlu0 %746, %v544
    %v748 = vpop.permute.xlu0 %747
    %v749 = vlaneseq
    %v750 = vshrl.u32 %v749, 7
    %v751 = vadd.s32 %v750, 88
    %752 = vset.pattern.permute.xlu0 %v751
    %753 = vperm.xlu0 %752, %v544
    %v754 = vpop.permute.xlu0 %753
    %v755 = vlaneseq
    %v756 = vshrl.u32 %v755, 7
    %v757 = vadd.s32 %v756, 80
    %758 = vset.pattern.permute.xlu0 %v757
    %759 = vperm.xlu0 %758, %v557
    %v760 = vpop.permute.xlu0 %759
    %v761 = vlaneseq
    %v762 = vshrl.u32 %v761, 7
    %v763 = vadd.s32 %v762, 88
    %764 = vset.pattern.permute.xlu0 %v763
    %765 = vperm.xlu0 %764, %v557
    %v766 = vpop.permute.xlu0 %765
    %v767 = vlaneseq
    %v768 = vshrl.u32 %v767, 7
    %v769 = vadd.s32 %v768, 80
    %770 = vset.pattern.permute.xlu0 %v769
    %771 = vperm.xlu0 %770, %v570
    %v772 = vpop.permute.xlu0 %771
    %v773 = vlaneseq
    %v774 = vshrl.u32 %v773, 7
    %v775 = vadd.s32 %v774, 88
    %776 = vset.pattern.permute.xlu0 %v775
    %777 = vperm.xlu0 %776, %v570
    %v778 = vpop.permute.xlu0 %777
    %v779 = vlaneseq
    %v780 = vshrl.u32 %v779, 7
    %v781 = vadd.s32 %v780, 80
    %782 = vset.pattern.permute.xlu0 %v781
    %783 = vperm.xlu0 %782, %v583
    %v784 = vpop.permute.xlu0 %783
    %v785 = vlaneseq
    %v786 = vshrl.u32 %v785, 7
    %v787 = vadd.s32 %v786, 88
    %788 = vset.pattern.permute.xlu0 %v787
    %789 = vperm.xlu0 %788, %v583
    %v790 = vpop.permute.xlu0 %789
    %v791 = vlaneseq
    %v792 = vshrl.u32 %v791, 7
    %v793 = vadd.s32 %v792, 80
    %794 = vset.pattern.permute.xlu0 %v793
    %795 = vperm.xlu0 %794, %v596
    %v796 = vpop.permute.xlu0 %795
    %v797 = vlaneseq
    %v798 = vshrl.u32 %v797, 7
    %v799 = vadd.s32 %v798, 88
    %800 = vset.pattern.permute.xlu0 %v799
    %801 = vperm.xlu0 %800, %v596
    %v802 = vpop.permute.xlu0 %801
    %v803 = vlaneseq
    %v804 = vshrl.u32 %v803, 7
    %v805 = vadd.s32 %v804, 80
    %806 = vset.pattern.permute.xlu0 %v805
    %807 = vperm.xlu0 %806, %v609
    %v808 = vpop.permute.xlu0 %807
    %v809 = vlaneseq
    %v810 = vshrl.u32 %v809, 7
    %v811 = vadd.s32 %v810, 88
    %812 = vset.pattern.permute.xlu0 %v811
    %813 = vperm.xlu0 %812, %v609
    %v814 = vpop.permute.xlu0 %813
    %v815 = vlaneseq
    %v816 = vshrl.u32 %v815, 7
    %v817 = vadd.s32 %v816, 80
    %818 = vset.pattern.permute.xlu0 %v817
    %819 = vperm.xlu0 %818, %v622
    %v820 = vpop.permute.xlu0 %819
    %v821 = vlaneseq
    %v822 = vshrl.u32 %v821, 7
    %v823 = vadd.s32 %v822, 88
    %824 = vset.pattern.permute.xlu0 %v823
    %825 = vperm.xlu0 %824, %v622
    %v826 = vpop.permute.xlu0 %825
    %v827 = vperm.slane %v415, 0
    %v828 = vmul.f32 %v827, %v423
    %v829 = vmul.f32 %v827, %v424
    %v830 = vmul.f32 %v828, 1.442695
    %v831 = vpow.pop %v830
    %v832 = vmul.f32 %v829, 1.442695
    %v833 = vpow.pop %v832
    %v834 = vmul.f32 %v831, 0.0
    %v835 = vmul.f32 %v833, 0.0
    %v836 = vperm.slane %v425, 0
    %v837 = vmul.f32 %v836, %v433
    %v838 = vmul.f32 %v836, %v439
    %v839 = vadd.f32 %v834, %v837
    %v840 = vadd.f32 %v835, %v838
    %v841 = vmul.f32 %v839, %v640
    %v842 = vmul.f32 %v840, %v646
    %v843 = vsel %vm363, %v841, 0.0
    %v844 = vsel %vm363, %v842, 0.0
    %v845 = vadd.f32 %v843, %v844
    %v846 = vrot.slane %v845, 4
    %v847 = vadd.f32 %v845, %v846
    %v848 = vrot.slane %v847, 2
    %v849 = vadd.f32 %v847, %v848
    %v850 = vrot.slane %v849, 1
    %v851 = vadd.f32 %v849, %v850
    %v852 = vperm.slane %v415, 1
    %v853 = vmul.f32 %v852, %v423
    %v854 = vmul.f32 %v852, %v424
    %v855 = vmul.f32 %v853, 1.442695
    %v856 = vpow.pop %v855
    %v857 = vmul.f32 %v854, 1.442695
    %v858 = vpow.pop %v857
    %v859 = vmul.f32 %v856, %v839
    %v860 = vmul.f32 %v858, %v840
    %v861 = vperm.slane %v425, 1
    %v862 = vmul.f32 %v861, %v446
    %v863 = vmul.f32 %v861, %v452
    %v864 = vadd.f32 %v859, %v862
    %v865 = vadd.f32 %v860, %v863
    %v866 = vmul.f32 %v864, %v652
    %v867 = vmul.f32 %v865, %v658
    %v868 = vsel %vm363, %v866, 0.0
    %v869 = vsel %vm363, %v867, 0.0
    %v870 = vadd.f32 %v868, %v869
    %v871 = vrot.slane %v870, 4
    %v872 = vadd.f32 %v870, %v871
    %v873 = vrot.slane %v872, 2
    %v874 = vadd.f32 %v872, %v873
    %v875 = vrot.slane %v874, 1
    %v876 = vadd.f32 %v874, %v875
    %v877 = vperm.slane %v415, 2
    %v878 = vmul.f32 %v877, %v423
    %v879 = vmul.f32 %v877, %v424
    %v880 = vmul.f32 %v878, 1.442695
    %v881 = vpow.pop %v880
    %v882 = vmul.f32 %v879, 1.442695
    %v883 = vpow.pop %v882
    %v884 = vmul.f32 %v881, %v864
    %v885 = vmul.f32 %v883, %v865
    %v886 = vperm.slane %v425, 2
    %v887 = vmul.f32 %v886, %v459
    %v888 = vmul.f32 %v886, %v465
    %v889 = vadd.f32 %v884, %v887
    %v890 = vadd.f32 %v885, %v888
    %v891 = vmul.f32 %v889, %v664
    %v892 = vmul.f32 %v890, %v670
    %v893 = vsel %vm363, %v891, 0.0
    %v894 = vsel %vm363, %v892, 0.0
    %v895 = vadd.f32 %v893, %v894
    %v896 = vrot.slane %v895, 4
    %v897 = vadd.f32 %v895, %v896
    %v898 = vrot.slane %v897, 2
    %v899 = vadd.f32 %v897, %v898
    %v900 = vrot.slane %v899, 1
    %v901 = vadd.f32 %v899, %v900
    %v902 = vperm.slane %v415, 3
    %v903 = vmul.f32 %v902, %v423
    %v904 = vmul.f32 %v902, %v424
    %v905 = vmul.f32 %v903, 1.442695
    %v906 = vpow.pop %v905
    %v907 = vmul.f32 %v904, 1.442695
    %v908 = vpow.pop %v907
    %v909 = vmul.f32 %v906, %v889
    %v910 = vmul.f32 %v908, %v890
    %v911 = vperm.slane %v425, 3
    %v912 = vmul.f32 %v911, %v472
    %v913 = vmul.f32 %v911, %v478
    %v914 = vadd.f32 %v909, %v912
    %v915 = vadd.f32 %v910, %v913
    %v916 = vmul.f32 %v914, %v676
    %v917 = vmul.f32 %v915, %v682
    %v918 = vsel %vm363, %v916, 0.0
    %v919 = vsel %vm363, %v917, 0.0
    %v920 = vadd.f32 %v918, %v919
    %v921 = vrot.slane %v920, 4
    %v922 = vadd.f32 %v920, %v921
    %v923 = vrot.slane %v922, 2
    %v924 = vadd.f32 %v922, %v923
    %v925 = vrot.slane %v924, 1
    %v926 = vadd.f32 %v924, %v925
    %v927 = vperm.slane %v415, 4
    %v928 = vmul.f32 %v927, %v423
    %v929 = vmul.f32 %v927, %v424
    %v930 = vmul.f32 %v928, 1.442695
    %v931 = vpow.pop %v930
    %v932 = vmul.f32 %v929, 1.442695
    %v933 = vpow.pop %v932
    %v934 = vmul.f32 %v931, %v914
    %v935 = vmul.f32 %v933, %v915
    %v936 = vperm.slane %v425, 4
    %v937 = vmul.f32 %v936, %v485
    %v938 = vmul.f32 %v936, %v491
    %v939 = vadd.f32 %v934, %v937
    %v940 = vadd.f32 %v935, %v938
    %v941 = vmul.f32 %v939, %v688
    %v942 = vmul.f32 %v940, %v694
    %v943 = vsel %vm363, %v941, 0.0
    %v944 = vsel %vm363, %v942, 0.0
    %v945 = vadd.f32 %v943, %v944
    %v946 = vrot.slane %v945, 4
    %v947 = vadd.f32 %v945, %v946
    %v948 = vrot.slane %v947, 2
    %v949 = vadd.f32 %v947, %v948
    %v950 = vrot.slane %v949, 1
    %v951 = vadd.f32 %v949, %v950
    %v952 = vperm.slane %v415, 5
    %v953 = vmul.f32 %v952, %v423
    %v954 = vmul.f32 %v952, %v424
    %v955 = vmul.f32 %v953, 1.442695
    %v956 = vpow.pop %v955
    %v957 = vmul.f32 %v954, 1.442695
    %v958 = vpow.pop %v957
    %v959 = vmul.f32 %v956, %v939
    %v960 = vmul.f32 %v958, %v940
    %v961 = vperm.slane %v425, 5
    %v962 = vmul.f32 %v961, %v498
    %v963 = vmul.f32 %v961, %v504
    %v964 = vadd.f32 %v959, %v962
    %v965 = vadd.f32 %v960, %v963
    %v966 = vmul.f32 %v964, %v700
    %v967 = vmul.f32 %v965, %v706
    %v968 = vsel %vm363, %v966, 0.0
    %v969 = vsel %vm363, %v967, 0.0
    %v970 = vadd.f32 %v968, %v969
    %v971 = vrot.slane %v970, 4
    %v972 = vadd.f32 %v970, %v971
    %v973 = vrot.slane %v972, 2
    %v974 = vadd.f32 %v972, %v973
    %v975 = vrot.slane %v974, 1
    %v976 = vadd.f32 %v974, %v975
    %v977 = vperm.slane %v415, 6
    %v978 = vmul.f32 %v977, %v423
    %v979 = vmul.f32 %v977, %v424
    %v980 = vmul.f32 %v978, 1.442695
    %v981 = vpow.pop %v980
    %v982 = vmul.f32 %v979, 1.442695
    %v983 = vpow.pop %v982
    %v984 = vmul.f32 %v981, %v964
    %v985 = vmul.f32 %v983, %v965
    %v986 = vperm.slane %v425, 6
    %v987 = vmul.f32 %v986, %v511
    %v988 = vmul.f32 %v986, %v517
    %v989 = vadd.f32 %v984, %v987
    %v990 = vadd.f32 %v985, %v988
    %v991 = vmul.f32 %v989, %v712
    %v992 = vmul.f32 %v990, %v718
    %v993 = vsel %vm363, %v991, 0.0
    %v994 = vsel %vm363, %v992, 0.0
    %v995 = vadd.f32 %v993, %v994
    %v996 = vrot.slane %v995, 4
    %v997 = vadd.f32 %v995, %v996
    %v998 = vrot.slane %v997, 2
    %v999 = vadd.f32 %v997, %v998
    %v1000 = vrot.slane %v999, 1
    %v1001 = vadd.f32 %v999, %v1000
    %v1002 = vperm.slane %v415, 7
    %v1003 = vmul.f32 %v1002, %v423
    %v1004 = vmul.f32 %v1002, %v424
    %v1005 = vmul.f32 %v1003, 1.442695
    %v1006 = vpow.pop %v1005
    %v1007 = vmul.f32 %v1004, 1.442695
    %v1008 = vpow.pop %v1007
    %v1009 = vmul.f32 %v1006, %v989
    %v1010 = vmul.f32 %v1008, %v990
    %v1011 = vperm.slane %v425, 7
    %v1012 = vmul.f32 %v1011, %v524
    %v1013 = vmul.f32 %v1011, %v530
    %v1014 = vadd.f32 %v1009, %v1012
    %v1015 = vadd.f32 %v1010, %v1013
    %v1016 = vmul.f32 %v1014, %v724
    %v1017 = vmul.f32 %v1015, %v730
    %v1018 = vsel %vm363, %v1016, 0.0
    %v1019 = vsel %vm363, %v1017, 0.0
    %v1020 = vadd.f32 %v1018, %v1019
    %v1021 = vrot.slane %v1020, 4
    %v1022 = vadd.f32 %v1020, %v1021
    %v1023 = vrot.slane %v1022, 2
    %v1024 = vadd.f32 %v1022, %v1023
    %v1025 = vrot.slane %v1024, 1
    %v1026 = vadd.f32 %v1024, %v1025
    %v1027 = vsel %vm189, %v851, %v876
    %v1028 = vsel %vm229, %v1027, %v901
    %v1029 = vsel %vm165, %v1028, %v926
    %v1030 = vsel %vm166, %v1029, %v951
    %vm1031 = vcmask 1044480
    %v1032 = vsel %vm1031, %v1030, %v976
    %vm1033 = vcmask 1045504
    %v1034 = vsel %vm1033, %v1032, %v1001
    %v1035 = vsel %vm193, %v1034, %v1026
    %v1036 = vperm.slane %v416, 0
    %v1037 = vmul.f32 %v1036, %v423
    %v1038 = vmul.f32 %v1036, %v424
    %v1039 = vmul.f32 %v1037, 1.442695
    %v1040 = vpow.pop %v1039
    %v1041 = vmul.f32 %v1038, 1.442695
    %v1042 = vpow.pop %v1041
    %v1043 = vmul.f32 %v1040, 0.0
    %v1044 = vmul.f32 %v1042, 0.0
    %v1045 = vperm.slane %v426, 0
    %v1046 = vmul.f32 %v1045, %v537
    %v1047 = vmul.f32 %v1045, %v543
    %v1048 = vadd.f32 %v1043, %v1046
    %v1049 = vadd.f32 %v1044, %v1047
    %v1050 = vmul.f32 %v1048, %v736
    %v1051 = vmul.f32 %v1049, %v742
    %v1052 = vsel %vm363, %v1050, 0.0
    %v1053 = vsel %vm363, %v1051, 0.0
    %v1054 = vadd.f32 %v1052, %v1053
    %v1055 = vrot.slane %v1054, 4
    %v1056 = vadd.f32 %v1054, %v1055
    %v1057 = vrot.slane %v1056, 2
    %v1058 = vadd.f32 %v1056, %v1057
    %v1059 = vrot.slane %v1058, 1
    %v1060 = vadd.f32 %v1058, %v1059
    %v1061 = vperm.slane %v416, 1
    %v1062 = vmul.f32 %v1061, %v423
    %v1063 = vmul.f32 %v1061, %v424
    %v1064 = vmul.f32 %v1062, 1.442695
    %v1065 = vpow.pop %v1064
    %v1066 = vmul.f32 %v1063, 1.442695
    %v1067 = vpow.pop %v1066
    %v1068 = vmul.f32 %v1065, %v1048
    %v1069 = vmul.f32 %v1067, %v1049
    %v1070 = vperm.slane %v426, 1
    %v1071 = vmul.f32 %v1070, %v550
    %v1072 = vmul.f32 %v1070, %v556
    %v1073 = vadd.f32 %v1068, %v1071
    %v1074 = vadd.f32 %v1069, %v1072
    %v1075 = vmul.f32 %v1073, %v748
    %v1076 = vmul.f32 %v1074, %v754
    %v1077 = vsel %vm363, %v1075, 0.0
    %v1078 = vsel %vm363, %v1076, 0.0
    %v1079 = vadd.f32 %v1077, %v1078
    %v1080 = vrot.slane %v1079, 4
    %v1081 = vadd.f32 %v1079, %v1080
    %v1082 = vrot.slane %v1081, 2
    %v1083 = vadd.f32 %v1081, %v1082
    %v1084 = vrot.slane %v1083, 1
    %v1085 = vadd.f32 %v1083, %v1084
    %v1086 = vperm.slane %v416, 2
    %v1087 = vmul.f32 %v1086, %v423
    %v1088 = vmul.f32 %v1086, %v424
    %v1089 = vmul.f32 %v1087, 1.442695
    %v1090 = vpow.pop %v1089
    %v1091 = vmul.f32 %v1088, 1.442695
    %v1092 = vpow.pop %v1091
    %v1093 = vmul.f32 %v1090, %v1073
    %v1094 = vmul.f32 %v1092, %v1074
    %v1095 = vperm.slane %v426, 2
    %v1096 = vmul.f32 %v1095, %v563
    %v1097 = vmul.f32 %v1095, %v569
    %v1098 = vadd.f32 %v1093, %v1096
    %v1099 = vadd.f32 %v1094, %v1097
    %v1100 = vmul.f32 %v1098, %v760
    %v1101 = vmul.f32 %v1099, %v766
    %v1102 = vsel %vm363, %v1100, 0.0
    %v1103 = vsel %vm363, %v1101, 0.0
    %v1104 = vadd.f32 %v1102, %v1103
    %v1105 = vrot.slane %v1104, 4
    %v1106 = vadd.f32 %v1104, %v1105
    %v1107 = vrot.slane %v1106, 2
    %v1108 = vadd.f32 %v1106, %v1107
    %v1109 = vrot.slane %v1108, 1
    %v1110 = vadd.f32 %v1108, %v1109
    %v1111 = vperm.slane %v416, 3
    %v1112 = vmul.f32 %v1111, %v423
    %v1113 = vmul.f32 %v1111, %v424
    %v1114 = vmul.f32 %v1112, 1.442695
    %v1115 = vpow.pop %v1114
    %v1116 = vmul.f32 %v1113, 1.442695
    %v1117 = vpow.pop %v1116
    %v1118 = vmul.f32 %v1115, %v1098
    %v1119 = vmul.f32 %v1117, %v1099
    %v1120 = vperm.slane %v426, 3
    %v1121 = vmul.f32 %v1120, %v576
    %v1122 = vmul.f32 %v1120, %v582
    %v1123 = vadd.f32 %v1118, %v1121
    %v1124 = vadd.f32 %v1119, %v1122
    %v1125 = vmul.f32 %v1123, %v772
    %v1126 = vmul.f32 %v1124, %v778
    %v1127 = vsel %vm363, %v1125, 0.0
    %v1128 = vsel %vm363, %v1126, 0.0
    %v1129 = vadd.f32 %v1127, %v1128
    %v1130 = vrot.slane %v1129, 4
    %v1131 = vadd.f32 %v1129, %v1130
    %v1132 = vrot.slane %v1131, 2
    %v1133 = vadd.f32 %v1131, %v1132
    %v1134 = vrot.slane %v1133, 1
    %v1135 = vadd.f32 %v1133, %v1134
    %v1136 = vperm.slane %v416, 4
    %v1137 = vmul.f32 %v1136, %v423
    %v1138 = vmul.f32 %v1136, %v424
    %v1139 = vmul.f32 %v1137, 1.442695
    %v1140 = vpow.pop %v1139
    %v1141 = vmul.f32 %v1138, 1.442695
    %v1142 = vpow.pop %v1141
    %v1143 = vmul.f32 %v1140, %v1123
    %v1144 = vmul.f32 %v1142, %v1124
    %v1145 = vperm.slane %v426, 4
    %v1146 = vmul.f32 %v1145, %v589
    %v1147 = vmul.f32 %v1145, %v595
    %v1148 = vadd.f32 %v1143, %v1146
    %v1149 = vadd.f32 %v1144, %v1147
    %v1150 = vmul.f32 %v1148, %v784
    %v1151 = vmul.f32 %v1149, %v790
    %v1152 = vsel %vm363, %v1150, 0.0
    %v1153 = vsel %vm363, %v1151, 0.0
    %v1154 = vadd.f32 %v1152, %v1153
    %v1155 = vrot.slane %v1154, 4
    %v1156 = vadd.f32 %v1154, %v1155
    %v1157 = vrot.slane %v1156, 2
    %v1158 = vadd.f32 %v1156, %v1157
    %v1159 = vrot.slane %v1158, 1
    %v1160 = vadd.f32 %v1158, %v1159
    %v1161 = vperm.slane %v416, 5
    %v1162 = vmul.f32 %v1161, %v423
    %v1163 = vmul.f32 %v1161, %v424
    %v1164 = vmul.f32 %v1162, 1.442695
    %v1165 = vpow.pop %v1164
    %v1166 = vmul.f32 %v1163, 1.442695
    %v1167 = vpow.pop %v1166
    %v1168 = vmul.f32 %v1165, %v1148
    %v1169 = vmul.f32 %v1167, %v1149
    %v1170 = vperm.slane %v426, 5
    %v1171 = vmul.f32 %v1170, %v602
    %v1172 = vmul.f32 %v1170, %v608
    %v1173 = vadd.f32 %v1168, %v1171
    %v1174 = vadd.f32 %v1169, %v1172
    %v1175 = vmul.f32 %v1173, %v796
    %v1176 = vmul.f32 %v1174, %v802
    %v1177 = vsel %vm363, %v1175, 0.0
    %v1178 = vsel %vm363, %v1176, 0.0
    %v1179 = vadd.f32 %v1177, %v1178
    %v1180 = vrot.slane %v1179, 4
    %v1181 = vadd.f32 %v1179, %v1180
    %v1182 = vrot.slane %v1181, 2
    %v1183 = vadd.f32 %v1181, %v1182
    %v1184 = vrot.slane %v1183, 1
    %v1185 = vadd.f32 %v1183, %v1184
    %v1186 = vperm.slane %v416, 6
    %v1187 = vmul.f32 %v1186, %v423
    %v1188 = vmul.f32 %v1186, %v424
    %v1189 = vmul.f32 %v1187, 1.442695
    %v1190 = vpow.pop %v1189
    %v1191 = vmul.f32 %v1188, 1.442695
    %v1192 = vpow.pop %v1191
    %v1193 = vmul.f32 %v1190, %v1173
    %v1194 = vmul.f32 %v1192, %v1174
    %v1195 = vperm.slane %v426, 6
    %v1196 = vmul.f32 %v1195, %v615
    %v1197 = vmul.f32 %v1195, %v621
    %v1198 = vadd.f32 %v1193, %v1196
    %v1199 = vadd.f32 %v1194, %v1197
    %v1200 = vmul.f32 %v1198, %v808
    %v1201 = vmul.f32 %v1199, %v814
    %v1202 = vsel %vm363, %v1200, 0.0
    %v1203 = vsel %vm363, %v1201, 0.0
    %v1204 = vadd.f32 %v1202, %v1203
    %v1205 = vrot.slane %v1204, 4
    %v1206 = vadd.f32 %v1204, %v1205
    %v1207 = vrot.slane %v1206, 2
    %v1208 = vadd.f32 %v1206, %v1207
    %v1209 = vrot.slane %v1208, 1
    %v1210 = vadd.f32 %v1208, %v1209
    %v1211 = vperm.slane %v416, 7
    %v1212 = vmul.f32 %v1211, %v423
    %v1213 = vmul.f32 %v1211, %v424
    %v1214 = vmul.f32 %v1212, 1.442695
    %v1215 = vpow.pop %v1214
    %v1216 = vmul.f32 %v1213, 1.442695
    %v1217 = vpow.pop %v1216
    %v1218 = vmul.f32 %v1215, %v1198
    %v1219 = vmul.f32 %v1217, %v1199
    %v1220 = vperm.slane %v426, 7
    %v1221 = vmul.f32 %v1220, %v628
    %v1222 = vmul.f32 %v1220, %v634
    %v1223 = vadd.f32 %v1218, %v1221
    %v1224 = vadd.f32 %v1219, %v1222
    %v1225 = vmul.f32 %v1223, %v820
    %v1226 = vmul.f32 %v1224, %v826
    %v1227 = vsel %vm363, %v1225, 0.0
    %v1228 = vsel %vm363, %v1226, 0.0
    %v1229 = vadd.f32 %v1227, %v1228
    %v1230 = vrot.slane %v1229, 4
    %v1231 = vadd.f32 %v1229, %v1230
    %v1232 = vrot.slane %v1231, 2
    %v1233 = vadd.f32 %v1231, %v1232
    %v1234 = vrot.slane %v1233, 1
    %v1235 = vadd.f32 %v1233, %v1234
    %v1236 = vsel %vm189, %v1060, %v1085
    %v1237 = vsel %vm229, %v1236, %v1110
    %v1238 = vsel %vm165, %v1237, %v1135
    %v1239 = vsel %vm166, %v1238, %v1160
    %v1240 = vsel %vm1031, %v1239, %v1185
    %v1241 = vsel %vm1033, %v1240, %v1210
    %v1242 = vsel %vm193, %v1241, %v1235
    %v1243 = vld [vmem:[#allocation13] sm:$0x1]
    %v1245 = vperm.slane %v1243, 0
    %v1247 = vmul.f32 %v348, %v1245
    %v1248 = vmul.f32 %v349, %v1245
    %v1249 = vadd.f32 %v1035, %v1247
    %v1250 = vadd.f32 %v1242, %v1248
    %v1251 = vmul.f32 %v287, 0.5
    %v1252 = vmul.f32 %v289, 0.5
    %v1253 = vtanh.pop %v1251
    %v1254 = vtanh.pop %v1252
    %v1255 = vadd.f32 %v1253, 1.0
    %v1256 = vadd.f32 %v1254, 1.0
    %v1257 = vmul.f32 %v1255, 0.5
    %v1258 = vmul.f32 %v1256, 0.5
    %v1259 = vmul.f32 %v287, %v1257
    %v1260 = vmul.f32 %v289, %v1258
    %1263 = vrot.lane.b32.xlu0 %v1259, 64
    %v1264 = vpop.permute.xlu0 %1263
    %1265 = vrot.lane.b32.xlu0 %v1260, 64
    %v1266 = vpop.permute.xlu0 %1265
    %v1269 = vmul.f32 %v1249, %v1264
    %v1270 = vmul.f32 %v1250, %v1266
    %v1271 = vld [vmem:[%s13] sm:$0xff]
    %v1272 = vld [vmem:[%s13 + $0x8] sm:$0xff]
    %v1273 = vld [vmem:[%s13 + $0x10] sm:$0xff]
    %v1274 = vld [vmem:[%s13 + $0x18] sm:$0xff]
    %v1275 = vld [vmem:[%s13 + $0x20] sm:$0xff]
    %v1276 = vld [vmem:[%s13 + $0x28] sm:$0xff]
    %v1277 = vld [vmem:[%s13 + $0x30] sm:$0xff]
    %v1278 = vld [vmem:[%s13 + $0x38] sm:$0xff]
    %v1279 = vpack.c.bf16 %v1270, %v1269
    %v1280 = vpack.c.bf16 %v1272, %v1271
    %v1281 = vpack.c.bf16 %v1274, %v1273
    %v1282 = vpack.c.bf16 %v1276, %v1275
    %v1283 = vpack.c.bf16 %v1278, %v1277
    %v1285 = vsel %vm363, %v1279, 0
    %1287 = vmatpush.bf16.msra.mxu0 0
    %1288 = vmatpush.bf16.msra.mxu0 0
    %1289 = vmatpush.bf16.msra.mxu0 0
    %1290 = vmatpush.bf16.msra.mxu0 0
    %1291 = vmatpush.bf16.msra.mxu0 %v1283
    %1292 = vmatpush.bf16.msra.mxu0 %v1282
    %1293 = vmatpush.bf16.msra.mxu0 %v1281
    %1294 = vmatpush.bf16.msra.mxu0 %v1280
    %1295 = vmatmul.bf16.gmra.mxu0 %v1285
    %v1296 = vpop.f32.mrf.mxu0
    %v1297 = vadd.f32 0.0, %v1296
    %v1298 = vpop.f32.mrf.mxu0
    %v1299 = vadd.f32 0.0, %v1298
    %1300 = vdwg.mxu0
    %v1301 = vadd.f32 %v264, %v1297
    %v1302 = vadd.f32 %v265, %v1299
    %v1303 = vsel %vm273, %v1301, 0.0
    %1304 = vadd.xlane.f32.xlu0 %v1303
    %v1305 = vpop.xlane.xlu0 %1304
    %v1306 = vsel %vm273, %v1302, 0.0
    %1307 = vadd.xlane.f32.xlu0 %v1306
    %v1308 = vpop.xlane.xlu0 %1307
    %v1309 = vrcp.pop 32.0
    %v1310 = vmul.f32 32.0, %v1309
    %v1311 = vsub.f32 1.0, %v1310
    %v1312 = vmul.f32 %v1309, %v1311
    %v1313 = vadd.f32 %v1309, %v1312
    %vm1314 = vweird.f32 %v1309
    %v1315 = vsel %vm1314, %v1309, %v1313
    %v1316 = vmul.f32 %v1305, %v1315
    %v1317 = vmul.f32 %v1308, %v1315
    %v1318 = vsub.f32 %v1301, %v1316
    %v1319 = vsub.f32 %v1302, %v1317
    %v1320 = vmul.f32 %v1318, %v1318
    %v1321 = vmul.f32 %v1319, %v1319
    %v1322 = vsel %vm273, %v1320, 0.0
    %1323 = vadd.xlane.f32.xlu0 %v1322
    %v1324 = vpop.xlane.xlu0 %1323
    %v1325 = vsel %vm273, %v1321, 0.0
    %1326 = vadd.xlane.f32.xlu0 %v1325
    %v1327 = vpop.xlane.xlu0 %1326
    %v1328 = vmul.f32 %v1324, %v1315
    %v1329 = vmul.f32 %v1327, %v1315
    %v1330 = vadd.f32 %v1328, 1e-05
    %v1331 = vadd.f32 %v1329, 1e-05
    %v1332 = vrsqrt.pop %v1330
    %v1333 = vmul.f32 %v1332, %v1330
    %v1334 = vmul.f32 %v1333, %v1332
    %v1335 = vmul.f32 0.5, %v1334
    %v1336 = vsub.f32 1.5, %v1335
    %v1337 = vmul.f32 %v1332, %v1336
    %vm1338 = vweird.f32 %v1330
    %vm1339 = vweird.f32 %v1332
    %vm1340 = vmor %vm1338, %vm1339
    %v1341 = vsel %vm1340, %v1332, %v1337
    %v1342 = vrsqrt.pop %v1331
    %v1343 = vmul.f32 %v1342, %v1331
    %v1344 = vmul.f32 %v1343, %v1342
    %v1345 = vmul.f32 0.5, %v1344
    %v1346 = vsub.f32 1.5, %v1345
    %v1347 = vmul.f32 %v1342, %v1346
    %vm1348 = vweird.f32 %v1331
    %vm1349 = vweird.f32 %v1342
    %vm1350 = vmor %vm1348, %vm1349
    %v1351 = vsel %vm1350, %v1342, %v1347
    %v1352 = vmul.f32 %v1318, %v1341
    %v1353 = vmul.f32 %v1319, %v1351
    %v1354 = vld [vmem:[%s14] sm:$0x1]
    %v1356 = vperm.slane %v1354, 0
    %v1358 = vmul.f32 %v1352, %v1356
    %v1359 = vmul.f32 %v1353, %v1356
    %v1360 = vld [vmem:[#allocation15] sm:$0x1]
    %v1362 = vperm.slane %v1360, 0
    %v1364 = vadd.f32 %v1358, %v1362
    %v1365 = vadd.f32 %v1359, %v1362
    %1366 = vst.msk [vmem:[#allocation16] sm:$0xff] %vm273, %v1364
    %1367 = vst.msk [vmem:[#allocation16 + $0x8] sm:$0xff] %vm273, %v1365
    // Predicated region
    $region90: #{tpu_custom_call.1} parent=1 // pred_check
      _
    $region91: #{tpu_custom_call.1} parent=1 // pred_check_branch
      %1369 = sbr.rel (0) target = $region93
    $region92: #{tpu_custom_call.1} parent=1 // pred_region
      %1371 = vsyncadd [#allocation6], 0
      %s1372 = sshll.u32 [#allocation16], 4
      %s1373 = int_to_ptr.vmem [resolvable:$true] %s1372
      %s1374 = sshll.u32 %s16, 4
      %s1375 = int_to_ptr.hbm [resolvable:$true] %s1374
      %1380 = dma.vmem_to_hbm [thread:$0]  %s1373, 256, %s1375, [#allocation6], 128, 128, 8
    $region93: #{tpu_custom_call.1} parent=1 // pred_fallthru
      _
    // Predicated region
    $region94: #{tpu_custom_call.1} parent=1 // pred_check
      _
    $region95: #{tpu_custom_call.1} parent=1 // pred_check_branch
      %1382 = sbr.rel (0) target = $region97
    $region96: #{tpu_custom_call.1} parent=1 // pred_region
      %1384 = dma.done [#allocation6], 256
    $region97: #{tpu_custom_call.1} parent=1 // pred_fallthru
      _
    %1385 = vsyncpa [#allocation5], 1
    %1386 = vsyncpa [#allocation8], 1
    %1387 = vsyncpa [#allocation11], 1
    %1388 = vsyncpa [#allocation14], 1
    %1389 = vsyncpa [#allocation6], 1

</llo_original>
